<compile_context>
chip_gen: v5e
topology: v5e:2x2
jax: 0.10.0
libtpu: 0.0.40
codegen_flags: <defaults>
</compile_context>

<pallas_src>
import jax
import jax.numpy as jnp
import numpy as np
from jax.experimental import pallas as pl
from jax.experimental.pallas import tpu as pltpu

# Small, deterministic hyper-parameters consistent with the module's __init__.
VOCAB_SIZE = 50
EMBEDDING_DIM = 32
HIDDEN_DIM = 32
OUTPUT_DIM = 1
N_LAYERS = 2
PAD_IDX = 1
SEQ_LEN = 8
BATCH = 2
BP = 8  # per-timestep rows padded to one sublane tile


# ----------------------------------------------------------------------------
# Kernel
# ----------------------------------------------------------------------------
def make_lstm_kernel(T, B, bp, H, n_layers):
    """Masked multi-layer bidirectional LSTM + FC, directions fully fused."""

    def kernel(*refs):
        # ---- unpack refs: inputs..., output, scratch ----
        mask_ref = refs[0]            # (T*BP, 2H) f32, 1.0 where step valid
        x_ref = refs[1]               # (T*BP, 2E) bf16, layer-0 combined input
        idx = 2
        layer_w = []                  # per layer: (W_ih_comb, W_hh_comb, bias)
        for _ in range(n_layers):
            layer_w.append((refs[idx], refs[idx + 1], refs[idx + 2]))
            idx += 3
        fcw_ref = refs[idx]           # (1, 2H) f32
        fcb_ref = refs[idx + 1]       # (1, 1)  f32
        out_ref = refs[idx + 2]       # (B, 1)
        gin_ref = refs[idx + 3]       # scratch (T*BP, 8H) f32 hoisted gates

        # Validity select operands: one aligned (BP, 2H) tile per step, hoisted
        # out of the recurrence and shared by both layers and both h/c selects.
        keeps = [mask_ref[s * bp:(s + 1) * bp, :] > 0.0 for s in range(T)]

        x_cur = x_ref[...]            # layer-0 combined input (bf16 value)
        h = jnp.zeros((bp, 2 * H), jnp.float32)

        for layer in range(n_layers):
            wih_ref, whh_ref, b_ref = layer_w[layer]

            # Hoisted input projection: ONE matmul covers both directions and
            # all timesteps (bias folded in); stored step-indexed & interleaved.
            gin_ref[...] = (
                jnp.dot(x_cur, wih_ref[...], preferred_element_type=jnp.float32)
                + b_ref[...])                                     # (T*BP, 8H)

            whh = whh_ref[...]        # (2H, 8H) bf16, block structured
            h = jnp.zeros((bp, 2 * H), jnp.float32)               # [h_fwd | h_bwd]
            c = jnp.zeros((bp, 2 * H), jnp.float32)
            step_h = []

            for s in range(T):
                # Single MXU push for both directions.
                hg = jnp.dot(h.astype(jnp.bfloat16), whh,
                             preferred_element_type=jnp.float32)  # (BP, 8H)
                g = hg + gin_ref[s * bp:(s + 1) * bp, :]          # aligned slab

                # Interleaved gate columns: [i|f|o -> sigmoid 0:6H], [g -> tanh]
                sg = jax.nn.sigmoid(g[:, 0:6 * H])
                gg = jnp.tanh(g[:, 6 * H:8 * H])
                i_g = sg[:, 0:2 * H]
                f_g = sg[:, 2 * H:4 * H]
                o_g = sg[:, 4 * H:6 * H]

                # Cell update + mask select ONCE on the full (BP, 2H) state.
                c_new = f_g * c + i_g * gg
                h_new = o_g * jnp.tanh(c_new)
                h = jnp.where(keeps[s], h_new, h)
                c = jnp.where(keeps[s], c_new, c)

                if layer < n_layers - 1:
                    step_h.append(h)

            if layer < n_layers - 1:
                # Next layer's combined per-step input: [seq(s) | seq(T-1-s)].
                # The H-block column permutation this implies is folded into
                # that layer's W_ih in the wrapper -> plain concats here.
                x_cur = jnp.concatenate(
                    [jnp.concatenate([step_h[s], step_h[T - 1 - s]], axis=-1)
                     for s in range(T)], axis=0).astype(jnp.bfloat16)

        # Top-layer final hidden is already [h_fwd | h_bwd] == cat(hidden[-2],
        # hidden[-1]); dropout on hidden is identity (inference).
        # FC (output_dim == 1): VPU multiply + lane reduction, no MXU drain.
        logits = jnp.sum(h * fcw_ref[...], axis=-1, keepdims=True) + fcb_ref[...]
        out_ref[...] = logits[0:B, :]

    return kernel


# ----------------------------------------------------------------------------
# Wrapper-side weight / input preparation
# ----------------------------------------------------------------------------
GATE_ORDER = ("i", "f", "o", "g")          # interleaved column-group order
_PT_GATE_ROWS = {"i": 0, "f": 1, "g": 2, "o": 3}  # PyTorch row-block order


def _gate_block(w, gate):
    """Rows of a PyTorch (4H, in) weight for `gate`, transposed -> (in, H)."""
    H = HIDDEN_DIM
    r = _PT_GATE_ROWS[gate] * H
    return w[r:r + H].T


def _bias_block(b, gate):
    H = HIDDEN_DIM
    r = _PT_GATE_ROWS[gate] * H
    return b[r:r + H]


def _col(gi, d):
    """Column slice for gate-group gi, direction d (0=fwd, 1=bwd)."""
    H = HIDDEN_DIM
    s = gi * 2 * H + d * H
    return slice(s, s + H)


def _build_layer_weights(layer, params):
    """Combined (direction-interleaved) W_ih, W_hh, bias for one layer."""
    H, E = HIDDEN_DIM, EMBEDDING_DIM
    wih_f, whh_f, bih_f, bhh_f = params["lstm"][layer][0]
    wih_b, whh_b, bih_b, bhh_b = params["lstm"][layer][1]

    in_comb = 2 * E if layer == 0 else 4 * H
    wih_comb = jnp.zeros((in_comb, 8 * H), jnp.float32)
    whh_comb = jnp.zeros((2 * H, 8 * H), jnp.float32)
    b_comb = jnp.zeros((8 * H,), jnp.float32)
    bf, bb = bih_f + bhh_f, bih_b + bhh_b

    for gi, g in enumerate(GATE_ORDER):
        cf, cb = _col(gi, 0), _col(gi, 1)
        blk_f, blk_b = _gate_block(wih_f, g), _gate_block(wih_b, g)
        if layer == 0:
            # combined input rows: [emb(t=s) (0:E) | emb(t=T-1-s) (E:2E)]
            wih_comb = wih_comb.at[0:E, cf].set(blk_f)
            wih_comb = wih_comb.at[E:2 * E, cb].set(blk_b)
        else:
            # combined input rows: [h_f(s) | h_b(T-1-s) | h_f(T-1-s) | h_b(s)]
            wih_comb = wih_comb.at[0:H, cf].set(blk_f[0:H])              # h_f(s)
            wih_comb = wih_comb.at[3 * H:4 * H, cf].set(blk_f[H:2 * H])  # h_b(s)
            wih_comb = wih_comb.at[2 * H:3 * H, cb].set(blk_b[0:H])      # h_f(rev)
            wih_comb = wih_comb.at[H:2 * H, cb].set(blk_b[H:2 * H])      # h_b(rev)
        # Recurrent weights: state is [h_fwd (0:H) | h_bwd (H:2H)].
        whh_comb = whh_comb.at[0:H, cf].set(_gate_block(whh_f, g))
        whh_comb = whh_comb.at[H:2 * H, cb].set(_gate_block(whh_b, g))
        b_comb = b_comb.at[cf].set(_bias_block(bf, g))
        b_comb = b_comb.at[cb].set(_bias_block(bb, g))

    return (wih_comb.astype(jnp.bfloat16),
            whh_comb.astype(jnp.bfloat16),
            b_comb[None, :])


def rnn_forward_pallas(text, text_lengths, params):
    """text: (T, B) int32, text_lengths: (B,) int32 -> (B, OUTPUT_DIM) f32."""
    T, B = text.shape
    E, H, O = EMBEDDING_DIM, HIDDEN_DIM, OUTPUT_DIM

    # Embedding gather + dropout (identity at inference) kept as JAX glue.
    emb = jnp.take(params["embedding"], text, axis=0).astype(jnp.float32)  # (T,B,E)
    emb_rev = emb[::-1]                                                    # time-rev
    x0 = jnp.concatenate([emb, emb_rev], axis=-1)                          # (T,B,2E)
    x0 = jnp.zeros((T, BP, 2 * E), jnp.float32).at[:, :B, :].set(x0)       # pad rows
    x0_flat = x0.reshape(T * BP, 2 * E).astype(jnp.bfloat16)

    # pack_padded_sequence emulation: step-indexed, direction-interleaved mask
    # (fwd half = t < len, bwd half = (T-1-s) < len), already at select layout.
    t_idx = jnp.arange(T)
    m_f = (t_idx[:, None] < text_lengths[None, :]).astype(jnp.float32)
    m_b = ((T - 1 - t_idx)[:, None] < text_lengths[None, :]).astype(jnp.float32)
    mask = jnp.concatenate(
        [jnp.broadcast_to(m_f[:, :, None], (T, B, H)),
         jnp.broadcast_to(m_b[:, :, None], (T, B, H))], axis=-1)           # (T,B,2H)
    mask = jnp.zeros((T, BP, 2 * H), jnp.float32).at[:, :B, :].set(mask)
    mask_flat = mask.reshape(T * BP, 2 * H)

    flat = [mask_flat, x0_flat]
    for layer in range(N_LAYERS):
        flat += list(_build_layer_weights(layer, params))
    flat += [params["fc_w"].astype(jnp.float32),              # (1, 2H)
             params["fc_b"].reshape(1, O).astype(jnp.float32)]

    kernel = make_lstm_kernel(T, B, BP, H, N_LAYERS)
    out = pl.pallas_call(
        kernel,
        out_shape=jax.ShapeDtypeStruct((B, O), jnp.float32),
        in_specs=[pl.BlockSpec(memory_space=pltpu.MemorySpace.VMEM)] * len(flat),
        out_specs=pl.BlockSpec(memory_space=pltpu.MemorySpace.VMEM),
        scratch_shapes=[
            pltpu.VMEM((T * BP, 8 * H), jnp.float32),  # hoisted input gates
        ],
    )(*flat)
    return out


# ----------------------------------------------------------------------------
# Parameters & pure-JAX reference
# ----------------------------------------------------------------------------
def init_params(key):
    E, H, O = EMBEDDING_DIM, HIDDEN_DIM, OUTPUT_DIM
    keys = jax.random.split(key, 4 + N_LAYERS * 2 * 4)
    ki = iter(range(len(keys)))

    emb = 0.1 * jax.random.normal(keys[next(ki)], (VOCAB_SIZE, E), jnp.float32)
    emb = emb.at[PAD_IDX].set(0.0)   # nn.Embedding(padding_idx=pad_idx)

    lstm = []
    for layer in range(N_LAYERS):
        in_size = E if layer == 0 else 2 * H
        dirs = []
        for _d in range(2):
            w_ih = 0.1 * jax.random.normal(keys[next(ki)], (4 * H, in_size), jnp.float32)
            w_hh = 0.1 * jax.random.normal(keys[next(ki)], (4 * H, H), jnp.float32)
            b_ih = 0.1 * jax.random.normal(keys[next(ki)], (4 * H,), jnp.float32)
            b_hh = 0.1 * jax.random.normal(keys[next(ki)], (4 * H,), jnp.float32)
            dirs.append((w_ih, w_hh, b_ih, b_hh))
        lstm.append(dirs)

    fc_w = 0.1 * jax.random.normal(keys[next(ki)], (O, 2 * H), jnp.float32)
    fc_b = 0.1 * jax.random.normal(keys[next(ki)], (O,), jnp.float32)
    return {"embedding": emb, "lstm": lstm, "fc_w": fc_w, "fc_b": fc_b}


def rnn_forward_reference(text, text_lengths, params):
    """Pure-JAX f32 reference with the same packed-LSTM (masked) semantics."""
    H = HIDDEN_DIM
    emb = jnp.take(params["embedding"], text, axis=0).astype(jnp.float32)
    T, B, _ = emb.shape
    mask = (jnp.arange(T)[:, None] < text_lengths[None, :]).astype(jnp.float32)

    seq = emb
    finals = None
    for layer in range(N_LAYERS):
        outs, finals = [], []
        for d in range(2):
            w_ih, w_hh, b_ih, b_hh = params["lstm"][layer][d]
            h = jnp.zeros((B, H), jnp.float32)
            c = jnp.zeros((B, H), jnp.float32)
            out_d = [None] * T
            ts = range(T) if d == 0 else range(T - 1, -1, -1)
            for t in ts:
                gates = seq[t] @ w_ih.T + h @ w_hh.T + b_ih + b_hh
                i_g = jax.nn.sigmoid(gates[:, 0:H])
                f_g = jax.nn.sigmoid(gates[:, H:2 * H])
                g_g = jnp.tanh(gates[:, 2 * H:3 * H])
                o_g = jax.nn.sigmoid(gates[:, 3 * H:4 * H])
                c_new = f_g * c + i_g * g_g
                h_new = o_g * jnp.tanh(c_new)
                m = mask[t][:, None]
                h = m * h_new + (1.0 - m) * h
                c = m * c_new + (1.0 - m) * c
                out_d[t] = h
            outs.append(jnp.stack(out_d))
            finals.append(h)
        seq = jnp.concatenate(outs, axis=-1)
    hid = jnp.concatenate(finals, axis=-1)   # [hidden[-2], hidden[-1]]
    return hid @ params["fc_w"].T + params["fc_b"]


if __name__ == "__main__":
    key = jax.random.PRNGKey(0)
    k_params, k_text = jax.random.split(key)

    params = init_params(k_params)

    # Deterministic example input: lengths sorted descending (as required by
    # pack_padded_sequence with enforce_sorted=True), padded with PAD_IDX.
    text_lengths = jnp.array([SEQ_LEN, 5], dtype=jnp.int32)          # (B,)
    text = jax.random.randint(k_text, (SEQ_LEN, BATCH), 2, VOCAB_SIZE)
    pad_positions = jnp.arange(SEQ_LEN)[:, None] >= text_lengths[None, :]
    text = jnp.where(pad_positions, PAD_IDX, text).astype(jnp.int32)  # (T, B)

    # TODO(synk): nn.Dropout / LSTM inter-layer dropout are identity here
    # (inference mode); the stochastic training-mode mask is not implemented.

    out = rnn_forward_pallas(text, text_lengths, params)
    out = jax.block_until_ready(out)

    ref = jax.block_until_ready(rnn_forward_reference(text, text_lengths, params))
    max_diff = float(jnp.max(jnp.abs(out - ref)))
    assert out.shape == (BATCH, OUTPUT_DIM), out.shape
    assert np.isfinite(np.asarray(out)).all()
    # Tolerance accounts for bf16 MXU operands (f32 accumulation / gate math).
    assert max_diff < 2e-2, f"mismatch vs reference: {max_diff}"

    print("KERNEL_OK")
</pallas_src>

<mosaic_0001>
module attributes {stable_mosaic.version = 11 : i64} {
  func.func @kernel(%arg0: memref<64x64xf32, #tpu.memory_space<vmem>>, %arg1: memref<64x64xbf16, #tpu.memory_space<vmem>>, %arg2: memref<64x256xbf16, #tpu.memory_space<vmem>>, %arg3: memref<64x256xbf16, #tpu.memory_space<vmem>>, %arg4: memref<1x256xf32, #tpu.memory_space<vmem>>, %arg5: memref<128x256xbf16, #tpu.memory_space<vmem>>, %arg6: memref<64x256xbf16, #tpu.memory_space<vmem>>, %arg7: memref<1x256xf32, #tpu.memory_space<vmem>>, %arg8: memref<1x64xf32, #tpu.memory_space<vmem>>, %arg9: memref<1x1xf32, #tpu.memory_space<vmem>>, %arg10: memref<2x1xf32, #tpu.memory_space<vmem>>, %arg11: memref<64x256xf32, #tpu.memory_space<vmem>>) attributes {dimension_semantics = [], scalar_prefetch = 0 : i64, scratch_operands = 1 : i64, tpu.core_type = #tpu.core_type<tc>} {
    %c0 = arith.constant 0 : index
    %c0_0 = arith.constant 0 : index
    %0 = vector.load %arg0[%c0, %c0_0] : memref<64x64xf32, #tpu.memory_space<vmem>>, vector<8x64xf32>
    %cst = arith.constant 0.000000e+00 : f32
    %1 = vector.broadcast %cst : f32 to vector<8x64xf32>
    %2 = arith.cmpf ogt, %0, %1 : vector<8x64xf32>
    %c8 = arith.constant 8 : index
    %c0_1 = arith.constant 0 : index
    %3 = vector.load %arg0[%c8, %c0_1] : memref<64x64xf32, #tpu.memory_space<vmem>>, vector<8x64xf32>
    %cst_2 = arith.constant 0.000000e+00 : f32
    %4 = vector.broadcast %cst_2 : f32 to vector<8x64xf32>
    %5 = arith.cmpf ogt, %3, %4 : vector<8x64xf32>
    %c16 = arith.constant 16 : index
    %c0_3 = arith.constant 0 : index
    %6 = vector.load %arg0[%c16, %c0_3] : memref<64x64xf32, #tpu.memory_space<vmem>>, vector<8x64xf32>
    %cst_4 = arith.constant 0.000000e+00 : f32
    %7 = vector.broadcast %cst_4 : f32 to vector<8x64xf32>
    %8 = arith.cmpf ogt, %6, %7 : vector<8x64xf32>
    %c24 = arith.constant 24 : index
    %c0_5 = arith.constant 0 : index
    %9 = vector.load %arg0[%c24, %c0_5] : memref<64x64xf32, #tpu.memory_space<vmem>>, vector<8x64xf32>
    %cst_6 = arith.constant 0.000000e+00 : f32
    %10 = vector.broadcast %cst_6 : f32 to vector<8x64xf32>
    %11 = arith.cmpf ogt, %9, %10 : vector<8x64xf32>
    %c32 = arith.constant 32 : index
    %c0_7 = arith.constant 0 : index
    %12 = vector.load %arg0[%c32, %c0_7] : memref<64x64xf32, #tpu.memory_space<vmem>>, vector<8x64xf32>
    %cst_8 = arith.constant 0.000000e+00 : f32
    %13 = vector.broadcast %cst_8 : f32 to vector<8x64xf32>
    %14 = arith.cmpf ogt, %12, %13 : vector<8x64xf32>
    %c40 = arith.constant 40 : index
    %c0_9 = arith.constant 0 : index
    %15 = vector.load %arg0[%c40, %c0_9] : memref<64x64xf32, #tpu.memory_space<vmem>>, vector<8x64xf32>
    %cst_10 = arith.constant 0.000000e+00 : f32
    %16 = vector.broadcast %cst_10 : f32 to vector<8x64xf32>
    %17 = arith.cmpf ogt, %15, %16 : vector<8x64xf32>
    %c48 = arith.constant 48 : index
    %c0_11 = arith.constant 0 : index
    %18 = vector.load %arg0[%c48, %c0_11] : memref<64x64xf32, #tpu.memory_space<vmem>>, vector<8x64xf32>
    %cst_12 = arith.constant 0.000000e+00 : f32
    %19 = vector.broadcast %cst_12 : f32 to vector<8x64xf32>
    %20 = arith.cmpf ogt, %18, %19 : vector<8x64xf32>
    %c56 = arith.constant 56 : index
    %c0_13 = arith.constant 0 : index
    %21 = vector.load %arg0[%c56, %c0_13] : memref<64x64xf32, #tpu.memory_space<vmem>>, vector<8x64xf32>
    %cst_14 = arith.constant 0.000000e+00 : f32
    %22 = vector.broadcast %cst_14 : f32 to vector<8x64xf32>
    %23 = arith.cmpf ogt, %21, %22 : vector<8x64xf32>
    %c0_15 = arith.constant 0 : index
    %c0_16 = arith.constant 0 : index
    %24 = vector.load %arg1[%c0_15, %c0_16] : memref<64x64xbf16, #tpu.memory_space<vmem>>, vector<64x64xbf16>
    %c0_17 = arith.constant 0 : index
    %c0_18 = arith.constant 0 : index
    %25 = vector.load %arg2[%c0_17, %c0_18] : memref<64x256xbf16, #tpu.memory_space<vmem>>, vector<64x256xbf16>
    %cst_19 = arith.constant dense<0.000000e+00> : vector<64x256xf32>
    %26 = tpu.matmul %24, %25, %cst_19 {dimension_numbers = #tpu.dot_dimension_numbers<[1], [0], [0], [1], [0, 0, 1, 1], [], []>} : vector<64x64xbf16>, vector<64x256xbf16>, vector<64x256xf32> -> vector<64x256xf32>
    %c0_20 = arith.constant 0 : index
    %c0_21 = arith.constant 0 : index
    %27 = vector.load %arg4[%c0_20, %c0_21] : memref<1x256xf32, #tpu.memory_space<vmem>>, vector<1x256xf32>
    %28 = vector.broadcast %27 : vector<1x256xf32> to vector<64x256xf32>
    %29 = arith.addf %26, %28 : vector<64x256xf32>
    %c0_22 = arith.constant 0 : index
    %c0_23 = arith.constant 0 : index
    %30 = vector.load %arg11[%c0_22, %c0_23] : memref<64x256xf32, #tpu.memory_space<vmem>>, vector<64x256xf32>
    tpu.vector_store %arg11[%c0_22, %c0_23], %29 {strides = array<i32>} : memref<64x256xf32, #tpu.memory_space<vmem>>, vector<64x256xf32>,
    %c0_24 = arith.constant 0 : index
    %c0_25 = arith.constant 0 : index
    %31 = vector.load %arg3[%c0_24, %c0_25] : memref<64x256xbf16, #tpu.memory_space<vmem>>, vector<64x256xbf16>
    %cst_26 = arith.constant 0.000000e+00 : f32
    %32 = vector.broadcast %cst_26 : f32 to vector<8x64xf32>
    %cst_27 = arith.constant 0.000000e+00 : f32
    %33 = vector.broadcast %cst_27 : f32 to vector<8x64xf32>
    %34 = arith.truncf %32 : vector<8x64xf32> to vector<8x64xbf16>
    %cst_28 = arith.constant dense<0.000000e+00> : vector<8x256xf32>
    %35 = tpu.matmul %34, %31, %cst_28 {dimension_numbers = #tpu.dot_dimension_numbers<[1], [0], [0], [1], [0, 0, 1, 1], [], []>} : vector<8x64xbf16>, vector<64x256xbf16>, vector<8x256xf32> -> vector<8x256xf32>
    %c0_29 = arith.constant 0 : index
    %c0_30 = arith.constant 0 : index
    %36 = vector.load %arg11[%c0_29, %c0_30] : memref<64x256xf32, #tpu.memory_space<vmem>>, vector<8x256xf32>
    %37 = arith.addf %35, %36 : vector<8x256xf32>
    %38 = vector.extract_strided_slice %37 {offsets = [0, 0], sizes = [8, 192], strides = [1, 1]} : vector<8x256xf32> to vector<8x192xf32>
    %39 = arith.negf %38 : vector<8x192xf32>
    %40 = math.exp %39 : vector<8x192xf32>
    %cst_31 = arith.constant 1.000000e+00 : f32
    %41 = vector.broadcast %cst_31 : f32 to vector<8x192xf32>
    %42 = arith.addf %41, %40 : vector<8x192xf32>
    %43 = arith.divf %41, %42 : vector<8x192xf32>
    %44 = vector.extract_strided_slice %37 {offsets = [0, 192], sizes = [8, 64], strides = [1, 1]} : vector<8x256xf32> to vector<8x64xf32>
    %45 = math.tanh %44 : vector<8x64xf32>
    %46 = vector.extract_strided_slice %43 {offsets = [0, 0], sizes = [8, 64], strides = [1, 1]} : vector<8x192xf32> to vector<8x64xf32>
    %47 = vector.extract_strided_slice %43 {offsets = [0, 64], sizes = [8, 64], strides = [1, 1]} : vector<8x192xf32> to vector<8x64xf32>
    %48 = vector.extract_strided_slice %43 {offsets = [0, 128], sizes = [8, 64], strides = [1, 1]} : vector<8x192xf32> to vector<8x64xf32>
    %49 = arith.mulf %47, %33 : vector<8x64xf32>
    %50 = arith.mulf %46, %45 : vector<8x64xf32>
    %51 = arith.addf %49, %50 : vector<8x64xf32>
    %52 = math.tanh %51 : vector<8x64xf32>
    %53 = arith.mulf %48, %52 : vector<8x64xf32>
    %54 = arith.select %2, %53, %32 : vector<8x64xi1>, vector<8x64xf32>
    %55 = arith.select %2, %51, %33 : vector<8x64xi1>, vector<8x64xf32>
    %56 = arith.truncf %54 : vector<8x64xf32> to vector<8x64xbf16>
    %cst_32 = arith.constant dense<0.000000e+00> : vector<8x256xf32>
    %57 = tpu.matmul %56, %31, %cst_32 {dimension_numbers = #tpu.dot_dimension_numbers<[1], [0], [0], [1], [0, 0, 1, 1], [], []>} : vector<8x64xbf16>, vector<64x256xbf16>, vector<8x256xf32> -> vector<8x256xf32>
    %c8_33 = arith.constant 8 : index
    %c0_34 = arith.constant 0 : index
    %58 = vector.load %arg11[%c8_33, %c0_34] : memref<64x256xf32, #tpu.memory_space<vmem>>, vector<8x256xf32>
    %59 = arith.addf %57, %58 : vector<8x256xf32>
    %60 = vector.extract_strided_slice %59 {offsets = [0, 0], sizes = [8, 192], strides = [1, 1]} : vector<8x256xf32> to vector<8x192xf32>
    %61 = arith.negf %60 : vector<8x192xf32>
    %62 = math.exp %61 : vector<8x192xf32>
    %cst_35 = arith.constant 1.000000e+00 : f32
    %63 = vector.broadcast %cst_35 : f32 to vector<8x192xf32>
    %64 = arith.addf %63, %62 : vector<8x192xf32>
    %65 = arith.divf %63, %64 : vector<8x192xf32>
    %66 = vector.extract_strided_slice %59 {offsets = [0, 192], sizes = [8, 64], strides = [1, 1]} : vector<8x256xf32> to vector<8x64xf32>
    %67 = math.tanh %66 : vector<8x64xf32>
    %68 = vector.extract_strided_slice %65 {offsets = [0, 0], sizes = [8, 64], strides = [1, 1]} : vector<8x192xf32> to vector<8x64xf32>
    %69 = vector.extract_strided_slice %65 {offsets = [0, 64], sizes = [8, 64], strides = [1, 1]} : vector<8x192xf32> to vector<8x64xf32>
    %70 = vector.extract_strided_slice %65 {offsets = [0, 128], sizes = [8, 64], strides = [1, 1]} : vector<8x192xf32> to vector<8x64xf32>
    %71 = arith.mulf %69, %55 : vector<8x64xf32>
    %72 = arith.mulf %68, %67 : vector<8x64xf32>
    %73 = arith.addf %71, %72 : vector<8x64xf32>
    %74 = math.tanh %73 : vector<8x64xf32>
    %75 = arith.mulf %70, %74 : vector<8x64xf32>
    %76 = arith.select %5, %75, %54 : vector<8x64xi1>, vector<8x64xf32>
    %77 = arith.select %5, %73, %55 : vector<8x64xi1>, vector<8x64xf32>
    %78 = arith.truncf %76 : vector<8x64xf32> to vector<8x64xbf16>
    %cst_36 = arith.constant dense<0.000000e+00> : vector<8x256xf32>
    %79 = tpu.matmul %78, %31, %cst_36 {dimension_numbers = #tpu.dot_dimension_numbers<[1], [0], [0], [1], [0, 0, 1, 1], [], []>} : vector<8x64xbf16>, vector<64x256xbf16>, vector<8x256xf32> -> vector<8x256xf32>
    %c16_37 = arith.constant 16 : index
    %c0_38 = arith.constant 0 : index
    %80 = vector.load %arg11[%c16_37, %c0_38] : memref<64x256xf32, #tpu.memory_space<vmem>>, vector<8x256xf32>
    %81 = arith.addf %79, %80 : vector<8x256xf32>
    %82 = vector.extract_strided_slice %81 {offsets = [0, 0], sizes = [8, 192], strides = [1, 1]} : vector<8x256xf32> to vector<8x192xf32>
    %83 = arith.negf %82 : vector<8x192xf32>
    %84 = math.exp %83 : vector<8x192xf32>
    %cst_39 = arith.constant 1.000000e+00 : f32
    %85 = vector.broadcast %cst_39 : f32 to vector<8x192xf32>
    %86 = arith.addf %85, %84 : vector<8x192xf32>
    %87 = arith.divf %85, %86 : vector<8x192xf32>
    %88 = vector.extract_strided_slice %81 {offsets = [0, 192], sizes = [8, 64], strides = [1, 1]} : vector<8x256xf32> to vector<8x64xf32>
    %89 = math.tanh %88 : vector<8x64xf32>
    %90 = vector.extract_strided_slice %87 {offsets = [0, 0], sizes = [8, 64], strides = [1, 1]} : vector<8x192xf32> to vector<8x64xf32>
    %91 = vector.extract_strided_slice %87 {offsets = [0, 64], sizes = [8, 64], strides = [1, 1]} : vector<8x192xf32> to vector<8x64xf32>
    %92 = vector.extract_strided_slice %87 {offsets = [0, 128], sizes = [8, 64], strides = [1, 1]} : vector<8x192xf32> to vector<8x64xf32>
    %93 = arith.mulf %91, %77 : vector<8x64xf32>
    %94 = arith.mulf %90, %89 : vector<8x64xf32>
    %95 = arith.addf %93, %94 : vector<8x64xf32>
    %96 = math.tanh %95 : vector<8x64xf32>
    %97 = arith.mulf %92, %96 : vector<8x64xf32>
    %98 = arith.select %8, %97, %76 : vector<8x64xi1>, vector<8x64xf32>
    %99 = arith.select %8, %95, %77 : vector<8x64xi1>, vector<8x64xf32>
    %100 = arith.truncf %98 : vector<8x64xf32> to vector<8x64xbf16>
    %cst_40 = arith.constant dense<0.000000e+00> : vector<8x256xf32>
    %101 = tpu.matmul %100, %31, %cst_40 {dimension_numbers = #tpu.dot_dimension_numbers<[1], [0], [0], [1], [0, 0, 1, 1], [], []>} : vector<8x64xbf16>, vector<64x256xbf16>, vector<8x256xf32> -> vector<8x256xf32>
    %c24_41 = arith.constant 24 : index
    %c0_42 = arith.constant 0 : index
    %102 = vector.load %arg11[%c24_41, %c0_42] : memref<64x256xf32, #tpu.memory_space<vmem>>, vector<8x256xf32>
    %103 = arith.addf %101, %102 : vector<8x256xf32>
    %104 = vector.extract_strided_slice %103 {offsets = [0, 0], sizes = [8, 192], strides = [1, 1]} : vector<8x256xf32> to vector<8x192xf32>
    %105 = arith.negf %104 : vector<8x192xf32>
    %106 = math.exp %105 : vector<8x192xf32>
    %cst_43 = arith.constant 1.000000e+00 : f32
    %107 = vector.broadcast %cst_43 : f32 to vector<8x192xf32>
    %108 = arith.addf %107, %106 : vector<8x192xf32>
    %109 = arith.divf %107, %108 : vector<8x192xf32>
    %110 = vector.extract_strided_slice %103 {offsets = [0, 192], sizes = [8, 64], strides = [1, 1]} : vector<8x256xf32> to vector<8x64xf32>
    %111 = math.tanh %110 : vector<8x64xf32>
    %112 = vector.extract_strided_slice %109 {offsets = [0, 0], sizes = [8, 64], strides = [1, 1]} : vector<8x192xf32> to vector<8x64xf32>
    %113 = vector.extract_strided_slice %109 {offsets = [0, 64], sizes = [8, 64], strides = [1, 1]} : vector<8x192xf32> to vector<8x64xf32>
    %114 = vector.extract_strided_slice %109 {offsets = [0, 128], sizes = [8, 64], strides = [1, 1]} : vector<8x192xf32> to vector<8x64xf32>
    %115 = arith.mulf %113, %99 : vector<8x64xf32>
    %116 = arith.mulf %112, %111 : vector<8x64xf32>
    %117 = arith.addf %115, %116 : vector<8x64xf32>
    %118 = math.tanh %117 : vector<8x64xf32>
    %119 = arith.mulf %114, %118 : vector<8x64xf32>
    %120 = arith.select %11, %119, %98 : vector<8x64xi1>, vector<8x64xf32>
    %121 = arith.select %11, %117, %99 : vector<8x64xi1>, vector<8x64xf32>
    %122 = arith.truncf %120 : vector<8x64xf32> to vector<8x64xbf16>
    %cst_44 = arith.constant dense<0.000000e+00> : vector<8x256xf32>
    %123 = tpu.matmul %122, %31, %cst_44 {dimension_numbers = #tpu.dot_dimension_numbers<[1], [0], [0], [1], [0, 0, 1, 1], [], []>} : vector<8x64xbf16>, vector<64x256xbf16>, vector<8x256xf32> -> vector<8x256xf32>
    %c32_45 = arith.constant 32 : index
    %c0_46 = arith.constant 0 : index
    %124 = vector.load %arg11[%c32_45, %c0_46] : memref<64x256xf32, #tpu.memory_space<vmem>>, vector<8x256xf32>
    %125 = arith.addf %123, %124 : vector<8x256xf32>
    %126 = vector.extract_strided_slice %125 {offsets = [0, 0], sizes = [8, 192], strides = [1, 1]} : vector<8x256xf32> to vector<8x192xf32>
    %127 = arith.negf %126 : vector<8x192xf32>
    %128 = math.exp %127 : vector<8x192xf32>
    %cst_47 = arith.constant 1.000000e+00 : f32
    %129 = vector.broadcast %cst_47 : f32 to vector<8x192xf32>
    %130 = arith.addf %129, %128 : vector<8x192xf32>
    %131 = arith.divf %129, %130 : vector<8x192xf32>
    %132 = vector.extract_strided_slice %125 {offsets = [0, 192], sizes = [8, 64], strides = [1, 1]} : vector<8x256xf32> to vector<8x64xf32>
    %133 = math.tanh %132 : vector<8x64xf32>
    %134 = vector.extract_strided_slice %131 {offsets = [0, 0], sizes = [8, 64], strides = [1, 1]} : vector<8x192xf32> to vector<8x64xf32>
    %135 = vector.extract_strided_slice %131 {offsets = [0, 64], sizes = [8, 64], strides = [1, 1]} : vector<8x192xf32> to vector<8x64xf32>
    %136 = vector.extract_strided_slice %131 {offsets = [0, 128], sizes = [8, 64], strides = [1, 1]} : vector<8x192xf32> to vector<8x64xf32>
    %137 = arith.mulf %135, %121 : vector<8x64xf32>
    %138 = arith.mulf %134, %133 : vector<8x64xf32>
    %139 = arith.addf %137, %138 : vector<8x64xf32>
    %140 = math.tanh %139 : vector<8x64xf32>
    %141 = arith.mulf %136, %140 : vector<8x64xf32>
    %142 = arith.select %14, %141, %120 : vector<8x64xi1>, vector<8x64xf32>
    %143 = arith.select %14, %139, %121 : vector<8x64xi1>, vector<8x64xf32>
    %144 = arith.truncf %142 : vector<8x64xf32> to vector<8x64xbf16>
    %cst_48 = arith.constant dense<0.000000e+00> : vector<8x256xf32>
    %145 = tpu.matmul %144, %31, %cst_48 {dimension_numbers = #tpu.dot_dimension_numbers<[1], [0], [0], [1], [0, 0, 1, 1], [], []>} : vector<8x64xbf16>, vector<64x256xbf16>, vector<8x256xf32> -> vector<8x256xf32>
    %c40_49 = arith.constant 40 : index
    %c0_50 = arith.constant 0 : index
    %146 = vector.load %arg11[%c40_49, %c0_50] : memref<64x256xf32, #tpu.memory_space<vmem>>, vector<8x256xf32>
    %147 = arith.addf %145, %146 : vector<8x256xf32>
    %148 = vector.extract_strided_slice %147 {offsets = [0, 0], sizes = [8, 192], strides = [1, 1]} : vector<8x256xf32> to vector<8x192xf32>
    %149 = arith.negf %148 : vector<8x192xf32>
    %150 = math.exp %149 : vector<8x192xf32>
    %cst_51 = arith.constant 1.000000e+00 : f32
    %151 = vector.broadcast %cst_51 : f32 to vector<8x192xf32>
    %152 = arith.addf %151, %150 : vector<8x192xf32>
    %153 = arith.divf %151, %152 : vector<8x192xf32>
    %154 = vector.extract_strided_slice %147 {offsets = [0, 192], sizes = [8, 64], strides = [1, 1]} : vector<8x256xf32> to vector<8x64xf32>
    %155 = math.tanh %154 : vector<8x64xf32>
    %156 = vector.extract_strided_slice %153 {offsets = [0, 0], sizes = [8, 64], strides = [1, 1]} : vector<8x192xf32> to vector<8x64xf32>
    %157 = vector.extract_strided_slice %153 {offsets = [0, 64], sizes = [8, 64], strides = [1, 1]} : vector<8x192xf32> to vector<8x64xf32>
    %158 = vector.extract_strided_slice %153 {offsets = [0, 128], sizes = [8, 64], strides = [1, 1]} : vector<8x192xf32> to vector<8x64xf32>
    %159 = arith.mulf %157, %143 : vector<8x64xf32>
    %160 = arith.mulf %156, %155 : vector<8x64xf32>
    %161 = arith.addf %159, %160 : vector<8x64xf32>
    %162 = math.tanh %161 : vector<8x64xf32>
    %163 = arith.mulf %158, %162 : vector<8x64xf32>
    %164 = arith.select %17, %163, %142 : vector<8x64xi1>, vector<8x64xf32>
    %165 = arith.select %17, %161, %143 : vector<8x64xi1>, vector<8x64xf32>
    %166 = arith.truncf %164 : vector<8x64xf32> to vector<8x64xbf16>
    %cst_52 = arith.constant dense<0.000000e+00> : vector<8x256xf32>
    %167 = tpu.matmul %166, %31, %cst_52 {dimension_numbers = #tpu.dot_dimension_numbers<[1], [0], [0], [1], [0, 0, 1, 1], [], []>} : vector<8x64xbf16>, vector<64x256xbf16>, vector<8x256xf32> -> vector<8x256xf32>
    %c48_53 = arith.constant 48 : index
    %c0_54 = arith.constant 0 : index
    %168 = vector.load %arg11[%c48_53, %c0_54] : memref<64x256xf32, #tpu.memory_space<vmem>>, vector<8x256xf32>
    %169 = arith.addf %167, %168 : vector<8x256xf32>
    %170 = vector.extract_strided_slice %169 {offsets = [0, 0], sizes = [8, 192], strides = [1, 1]} : vector<8x256xf32> to vector<8x192xf32>
    %171 = arith.negf %170 : vector<8x192xf32>
    %172 = math.exp %171 : vector<8x192xf32>
    %cst_55 = arith.constant 1.000000e+00 : f32
    %173 = vector.broadcast %cst_55 : f32 to vector<8x192xf32>
    %174 = arith.addf %173, %172 : vector<8x192xf32>
    %175 = arith.divf %173, %174 : vector<8x192xf32>
    %176 = vector.extract_strided_slice %169 {offsets = [0, 192], sizes = [8, 64], strides = [1, 1]} : vector<8x256xf32> to vector<8x64xf32>
    %177 = math.tanh %176 : vector<8x64xf32>
    %178 = vector.extract_strided_slice %175 {offsets = [0, 0], sizes = [8, 64], strides = [1, 1]} : vector<8x192xf32> to vector<8x64xf32>
    %179 = vector.extract_strided_slice %175 {offsets = [0, 64], sizes = [8, 64], strides = [1, 1]} : vector<8x192xf32> to vector<8x64xf32>
    %180 = vector.extract_strided_slice %175 {offsets = [0, 128], sizes = [8, 64], strides = [1, 1]} : vector<8x192xf32> to vector<8x64xf32>
    %181 = arith.mulf %179, %165 : vector<8x64xf32>
    %182 = arith.mulf %178, %177 : vector<8x64xf32>
    %183 = arith.addf %181, %182 : vector<8x64xf32>
    %184 = math.tanh %183 : vector<8x64xf32>
    %185 = arith.mulf %180, %184 : vector<8x64xf32>
    %186 = arith.select %20, %185, %164 : vector<8x64xi1>, vector<8x64xf32>
    %187 = arith.select %20, %183, %165 : vector<8x64xi1>, vector<8x64xf32>
    %188 = arith.truncf %186 : vector<8x64xf32> to vector<8x64xbf16>
    %cst_56 = arith.constant dense<0.000000e+00> : vector<8x256xf32>
    %189 = tpu.matmul %188, %31, %cst_56 {dimension_numbers = #tpu.dot_dimension_numbers<[1], [0], [0], [1], [0, 0, 1, 1], [], []>} : vector<8x64xbf16>, vector<64x256xbf16>, vector<8x256xf32> -> vector<8x256xf32>
    %c56_57 = arith.constant 56 : index
    %c0_58 = arith.constant 0 : index
    %190 = vector.load %arg11[%c56_57, %c0_58] : memref<64x256xf32, #tpu.memory_space<vmem>>, vector<8x256xf32>
    %191 = arith.addf %189, %190 : vector<8x256xf32>
    %192 = vector.extract_strided_slice %191 {offsets = [0, 0], sizes = [8, 192], strides = [1, 1]} : vector<8x256xf32> to vector<8x192xf32>
    %193 = arith.negf %192 : vector<8x192xf32>
    %194 = math.exp %193 : vector<8x192xf32>
    %cst_59 = arith.constant 1.000000e+00 : f32
    %195 = vector.broadcast %cst_59 : f32 to vector<8x192xf32>
    %196 = arith.addf %195, %194 : vector<8x192xf32>
    %197 = arith.divf %195, %196 : vector<8x192xf32>
    %198 = vector.extract_strided_slice %191 {offsets = [0, 192], sizes = [8, 64], strides = [1, 1]} : vector<8x256xf32> to vector<8x64xf32>
    %199 = math.tanh %198 : vector<8x64xf32>
    %200 = vector.extract_strided_slice %197 {offsets = [0, 0], sizes = [8, 64], strides = [1, 1]} : vector<8x192xf32> to vector<8x64xf32>
    %201 = vector.extract_strided_slice %197 {offsets = [0, 64], sizes = [8, 64], strides = [1, 1]} : vector<8x192xf32> to vector<8x64xf32>
    %202 = vector.extract_strided_slice %197 {offsets = [0, 128], sizes = [8, 64], strides = [1, 1]} : vector<8x192xf32> to vector<8x64xf32>
    %203 = arith.mulf %201, %187 : vector<8x64xf32>
    %204 = arith.mulf %200, %199 : vector<8x64xf32>
    %205 = arith.addf %203, %204 : vector<8x64xf32>
    %206 = math.tanh %205 : vector<8x64xf32>
    %207 = arith.mulf %202, %206 : vector<8x64xf32>
    %208 = arith.select %23, %207, %186 : vector<8x64xi1>, vector<8x64xf32>
    %209 = tpu.concatenate %54, %208 in 1 : vector<8x64xf32>, vector<8x64xf32> -> vector<8x128xf32>
    %210 = tpu.concatenate %76, %186 in 1 : vector<8x64xf32>, vector<8x64xf32> -> vector<8x128xf32>
    %211 = tpu.concatenate %98, %164 in 1 : vector<8x64xf32>, vector<8x64xf32> -> vector<8x128xf32>
    %212 = tpu.concatenate %120, %142 in 1 : vector<8x64xf32>, vector<8x64xf32> -> vector<8x128xf32>
    %213 = tpu.concatenate %142, %120 in 1 : vector<8x64xf32>, vector<8x64xf32> -> vector<8x128xf32>
    %214 = tpu.concatenate %164, %98 in 1 : vector<8x64xf32>, vector<8x64xf32> -> vector<8x128xf32>
    %215 = tpu.concatenate %186, %76 in 1 : vector<8x64xf32>, vector<8x64xf32> -> vector<8x128xf32>
    %216 = tpu.concatenate %208, %54 in 1 : vector<8x64xf32>, vector<8x64xf32> -> vector<8x128xf32>
    %217 = tpu.concatenate %209, %210, %211, %212, %213, %214, %215, %216 in 0 : vector<8x128xf32>, vector<8x128xf32>, vector<8x128xf32>, vector<8x128xf32>, vector<8x128xf32>, vector<8x128xf32>, vector<8x128xf32>, vector<8x128xf32> -> vector<64x128xf32>
    %218 = arith.truncf %217 : vector<64x128xf32> to vector<64x128xbf16>
    %c0_60 = arith.constant 0 : index
    %c0_61 = arith.constant 0 : index
    %219 = vector.load %arg5[%c0_60, %c0_61] : memref<128x256xbf16, #tpu.memory_space<vmem>>, vector<128x256xbf16>
    %cst_62 = arith.constant dense<0.000000e+00> : vector<64x256xf32>
    %220 = tpu.matmul %218, %219, %cst_62 {dimension_numbers = #tpu.dot_dimension_numbers<[1], [0], [0], [1], [0, 0, 1, 1], [], []>} : vector<64x128xbf16>, vector<128x256xbf16>, vector<64x256xf32> -> vector<64x256xf32>
    %c0_63 = arith.constant 0 : index
    %c0_64 = arith.constant 0 : index
    %221 = vector.load %arg7[%c0_63, %c0_64] : memref<1x256xf32, #tpu.memory_space<vmem>>, vector<1x256xf32>
    %222 = vector.broadcast %221 : vector<1x256xf32> to vector<64x256xf32>
    %223 = arith.addf %220, %222 : vector<64x256xf32>
    %c0_65 = arith.constant 0 : index
    %c0_66 = arith.constant 0 : index
    %224 = vector.load %arg11[%c0_65, %c0_66] : memref<64x256xf32, #tpu.memory_space<vmem>>, vector<64x256xf32>
    tpu.vector_store %arg11[%c0_65, %c0_66], %223 {strides = array<i32>} : memref<64x256xf32, #tpu.memory_space<vmem>>, vector<64x256xf32>,
    %c0_67 = arith.constant 0 : index
    %c0_68 = arith.constant 0 : index
    %225 = vector.load %arg6[%c0_67, %c0_68] : memref<64x256xbf16, #tpu.memory_space<vmem>>, vector<64x256xbf16>
    %cst_69 = arith.constant 0.000000e+00 : f32
    %226 = vector.broadcast %cst_69 : f32 to vector<8x64xf32>
    %cst_70 = arith.constant 0.000000e+00 : f32
    %227 = vector.broadcast %cst_70 : f32 to vector<8x64xf32>
    %228 = arith.truncf %226 : vector<8x64xf32> to vector<8x64xbf16>
    %cst_71 = arith.constant dense<0.000000e+00> : vector<8x256xf32>
    %229 = tpu.matmul %228, %225, %cst_71 {dimension_numbers = #tpu.dot_dimension_numbers<[1], [0], [0], [1], [0, 0, 1, 1], [], []>} : vector<8x64xbf16>, vector<64x256xbf16>, vector<8x256xf32> -> vector<8x256xf32>
    %c0_72 = arith.constant 0 : index
    %c0_73 = arith.constant 0 : index
    %230 = vector.load %arg11[%c0_72, %c0_73] : memref<64x256xf32, #tpu.memory_space<vmem>>, vector<8x256xf32>
    %231 = arith.addf %229, %230 : vector<8x256xf32>
    %232 = vector.extract_strided_slice %231 {offsets = [0, 0], sizes = [8, 192], strides = [1, 1]} : vector<8x256xf32> to vector<8x192xf32>
    %233 = arith.negf %232 : vector<8x192xf32>
    %234 = math.exp %233 : vector<8x192xf32>
    %cst_74 = arith.constant 1.000000e+00 : f32
    %235 = vector.broadcast %cst_74 : f32 to vector<8x192xf32>
    %236 = arith.addf %235, %234 : vector<8x192xf32>
    %237 = arith.divf %235, %236 : vector<8x192xf32>
    %238 = vector.extract_strided_slice %231 {offsets = [0, 192], sizes = [8, 64], strides = [1, 1]} : vector<8x256xf32> to vector<8x64xf32>
    %239 = math.tanh %238 : vector<8x64xf32>
    %240 = vector.extract_strided_slice %237 {offsets = [0, 0], sizes = [8, 64], strides = [1, 1]} : vector<8x192xf32> to vector<8x64xf32>
    %241 = vector.extract_strided_slice %237 {offsets = [0, 64], sizes = [8, 64], strides = [1, 1]} : vector<8x192xf32> to vector<8x64xf32>
    %242 = vector.extract_strided_slice %237 {offsets = [0, 128], sizes = [8, 64], strides = [1, 1]} : vector<8x192xf32> to vector<8x64xf32>
    %243 = arith.mulf %241, %227 : vector<8x64xf32>
    %244 = arith.mulf %240, %239 : vector<8x64xf32>
    %245 = arith.addf %243, %244 : vector<8x64xf32>
    %246 = math.tanh %245 : vector<8x64xf32>
    %247 = arith.mulf %242, %246 : vector<8x64xf32>
    %248 = arith.select %2, %247, %226 : vector<8x64xi1>, vector<8x64xf32>
    %249 = arith.select %2, %245, %227 : vector<8x64xi1>, vector<8x64xf32>
    %250 = arith.truncf %248 : vector<8x64xf32> to vector<8x64xbf16>
    %cst_75 = arith.constant dense<0.000000e+00> : vector<8x256xf32>
    %251 = tpu.matmul %250, %225, %cst_75 {dimension_numbers = #tpu.dot_dimension_numbers<[1], [0], [0], [1], [0, 0, 1, 1], [], []>} : vector<8x64xbf16>, vector<64x256xbf16>, vector<8x256xf32> -> vector<8x256xf32>
    %c8_76 = arith.constant 8 : index
    %c0_77 = arith.constant 0 : index
    %252 = vector.load %arg11[%c8_76, %c0_77] : memref<64x256xf32, #tpu.memory_space<vmem>>, vector<8x256xf32>
    %253 = arith.addf %251, %252 : vector<8x256xf32>
    %254 = vector.extract_strided_slice %253 {offsets = [0, 0], sizes = [8, 192], strides = [1, 1]} : vector<8x256xf32> to vector<8x192xf32>
    %255 = arith.negf %254 : vector<8x192xf32>
    %256 = math.exp %255 : vector<8x192xf32>
    %cst_78 = arith.constant 1.000000e+00 : f32
    %257 = vector.broadcast %cst_78 : f32 to vector<8x192xf32>
    %258 = arith.addf %257, %256 : vector<8x192xf32>
    %259 = arith.divf %257, %258 : vector<8x192xf32>
    %260 = vector.extract_strided_slice %253 {offsets = [0, 192], sizes = [8, 64], strides = [1, 1]} : vector<8x256xf32> to vector<8x64xf32>
    %261 = math.tanh %260 : vector<8x64xf32>
    %262 = vector.extract_strided_slice %259 {offsets = [0, 0], sizes = [8, 64], strides = [1, 1]} : vector<8x192xf32> to vector<8x64xf32>
    %263 = vector.extract_strided_slice %259 {offsets = [0, 64], sizes = [8, 64], strides = [1, 1]} : vector<8x192xf32> to vector<8x64xf32>
    %264 = vector.extract_strided_slice %259 {offsets = [0, 128], sizes = [8, 64], strides = [1, 1]} : vector<8x192xf32> to vector<8x64xf32>
    %265 = arith.mulf %263, %249 : vector<8x64xf32>
    %266 = arith.mulf %262, %261 : vector<8x64xf32>
    %267 = arith.addf %265, %266 : vector<8x64xf32>
    %268 = math.tanh %267 : vector<8x64xf32>
    %269 = arith.mulf %264, %268 : vector<8x64xf32>
    %270 = arith.select %5, %269, %248 : vector<8x64xi1>, vector<8x64xf32>
    %271 = arith.select %5, %267, %249 : vector<8x64xi1>, vector<8x64xf32>
    %272 = arith.truncf %270 : vector<8x64xf32> to vector<8x64xbf16>
    %cst_79 = arith.constant dense<0.000000e+00> : vector<8x256xf32>
    %273 = tpu.matmul %272, %225, %cst_79 {dimension_numbers = #tpu.dot_dimension_numbers<[1], [0], [0], [1], [0, 0, 1, 1], [], []>} : vector<8x64xbf16>, vector<64x256xbf16>, vector<8x256xf32> -> vector<8x256xf32>
    %c16_80 = arith.constant 16 : index
    %c0_81 = arith.constant 0 : index
    %274 = vector.load %arg11[%c16_80, %c0_81] : memref<64x256xf32, #tpu.memory_space<vmem>>, vector<8x256xf32>
    %275 = arith.addf %273, %274 : vector<8x256xf32>
    %276 = vector.extract_strided_slice %275 {offsets = [0, 0], sizes = [8, 192], strides = [1, 1]} : vector<8x256xf32> to vector<8x192xf32>
    %277 = arith.negf %276 : vector<8x192xf32>
    %278 = math.exp %277 : vector<8x192xf32>
    %cst_82 = arith.constant 1.000000e+00 : f32
    %279 = vector.broadcast %cst_82 : f32 to vector<8x192xf32>
    %280 = arith.addf %279, %278 : vector<8x192xf32>
    %281 = arith.divf %279, %280 : vector<8x192xf32>
    %282 = vector.extract_strided_slice %275 {offsets = [0, 192], sizes = [8, 64], strides = [1, 1]} : vector<8x256xf32> to vector<8x64xf32>
    %283 = math.tanh %282 : vector<8x64xf32>
    %284 = vector.extract_strided_slice %281 {offsets = [0, 0], sizes = [8, 64], strides = [1, 1]} : vector<8x192xf32> to vector<8x64xf32>
    %285 = vector.extract_strided_slice %281 {offsets = [0, 64], sizes = [8, 64], strides = [1, 1]} : vector<8x192xf32> to vector<8x64xf32>
    %286 = vector.extract_strided_slice %281 {offsets = [0, 128], sizes = [8, 64], strides = [1, 1]} : vector<8x192xf32> to vector<8x64xf32>
    %287 = arith.mulf %285, %271 : vector<8x64xf32>
    %288 = arith.mulf %284, %283 : vector<8x64xf32>
    %289 = arith.addf %287, %288 : vector<8x64xf32>
    %290 = math.tanh %289 : vector<8x64xf32>
    %291 = arith.mulf %286, %290 : vector<8x64xf32>
    %292 = arith.select %8, %291, %270 : vector<8x64xi1>, vector<8x64xf32>
    %293 = arith.select %8, %289, %271 : vector<8x64xi1>, vector<8x64xf32>
    %294 = arith.truncf %292 : vector<8x64xf32> to vector<8x64xbf16>
    %cst_83 = arith.constant dense<0.000000e+00> : vector<8x256xf32>
    %295 = tpu.matmul %294, %225, %cst_83 {dimension_numbers = #tpu.dot_dimension_numbers<[1], [0], [0], [1], [0, 0, 1, 1], [], []>} : vector<8x64xbf16>, vector<64x256xbf16>, vector<8x256xf32> -> vector<8x256xf32>
    %c24_84 = arith.constant 24 : index
    %c0_85 = arith.constant 0 : index
    %296 = vector.load %arg11[%c24_84, %c0_85] : memref<64x256xf32, #tpu.memory_space<vmem>>, vector<8x256xf32>
    %297 = arith.addf %295, %296 : vector<8x256xf32>
    %298 = vector.extract_strided_slice %297 {offsets = [0, 0], sizes = [8, 192], strides = [1, 1]} : vector<8x256xf32> to vector<8x192xf32>
    %299 = arith.negf %298 : vector<8x192xf32>
    %300 = math.exp %299 : vector<8x192xf32>
    %cst_86 = arith.constant 1.000000e+00 : f32
    %301 = vector.broadcast %cst_86 : f32 to vector<8x192xf32>
    %302 = arith.addf %301, %300 : vector<8x192xf32>
    %303 = arith.divf %301, %302 : vector<8x192xf32>
    %304 = vector.extract_strided_slice %297 {offsets = [0, 192], sizes = [8, 64], strides = [1, 1]} : vector<8x256xf32> to vector<8x64xf32>
    %305 = math.tanh %304 : vector<8x64xf32>
    %306 = vector.extract_strided_slice %303 {offsets = [0, 0], sizes = [8, 64], strides = [1, 1]} : vector<8x192xf32> to vector<8x64xf32>
    %307 = vector.extract_strided_slice %303 {offsets = [0, 64], sizes = [8, 64], strides = [1, 1]} : vector<8x192xf32> to vector<8x64xf32>
    %308 = vector.extract_strided_slice %303 {offsets = [0, 128], sizes = [8, 64], strides = [1, 1]} : vector<8x192xf32> to vector<8x64xf32>
    %309 = arith.mulf %307, %293 : vector<8x64xf32>
    %310 = arith.mulf %306, %305 : vector<8x64xf32>
    %311 = arith.addf %309, %310 : vector<8x64xf32>
    %312 = math.tanh %311 : vector<8x64xf32>
    %313 = arith.mulf %308, %312 : vector<8x64xf32>
    %314 = arith.select %11, %313, %292 : vector<8x64xi1>, vector<8x64xf32>
    %315 = arith.select %11, %311, %293 : vector<8x64xi1>, vector<8x64xf32>
    %316 = arith.truncf %314 : vector<8x64xf32> to vector<8x64xbf16>
    %cst_87 = arith.constant dense<0.000000e+00> : vector<8x256xf32>
    %317 = tpu.matmul %316, %225, %cst_87 {dimension_numbers = #tpu.dot_dimension_numbers<[1], [0], [0], [1], [0, 0, 1, 1], [], []>} : vector<8x64xbf16>, vector<64x256xbf16>, vector<8x256xf32> -> vector<8x256xf32>
    %c32_88 = arith.constant 32 : index
    %c0_89 = arith.constant 0 : index
    %318 = vector.load %arg11[%c32_88, %c0_89] : memref<64x256xf32, #tpu.memory_space<vmem>>, vector<8x256xf32>
    %319 = arith.addf %317, %318 : vector<8x256xf32>
    %320 = vector.extract_strided_slice %319 {offsets = [0, 0], sizes = [8, 192], strides = [1, 1]} : vector<8x256xf32> to vector<8x192xf32>
    %321 = arith.negf %320 : vector<8x192xf32>
    %322 = math.exp %321 : vector<8x192xf32>
    %cst_90 = arith.constant 1.000000e+00 : f32
    %323 = vector.broadcast %cst_90 : f32 to vector<8x192xf32>
    %324 = arith.addf %323, %322 : vector<8x192xf32>
    %325 = arith.divf %323, %324 : vector<8x192xf32>
    %326 = vector.extract_strided_slice %319 {offsets = [0, 192], sizes = [8, 64], strides = [1, 1]} : vector<8x256xf32> to vector<8x64xf32>
    %327 = math.tanh %326 : vector<8x64xf32>
    %328 = vector.extract_strided_slice %325 {offsets = [0, 0], sizes = [8, 64], strides = [1, 1]} : vector<8x192xf32> to vector<8x64xf32>
    %329 = vector.extract_strided_slice %325 {offsets = [0, 64], sizes = [8, 64], strides = [1, 1]} : vector<8x192xf32> to vector<8x64xf32>
    %330 = vector.extract_strided_slice %325 {offsets = [0, 128], sizes = [8, 64], strides = [1, 1]} : vector<8x192xf32> to vector<8x64xf32>
    %331 = arith.mulf %329, %315 : vector<8x64xf32>
    %332 = arith.mulf %328, %327 : vector<8x64xf32>
    %333 = arith.addf %331, %332 : vector<8x64xf32>
    %334 = math.tanh %333 : vector<8x64xf32>
    %335 = arith.mulf %330, %334 : vector<8x64xf32>
    %336 = arith.select %14, %335, %314 : vector<8x64xi1>, vector<8x64xf32>
    %337 = arith.select %14, %333, %315 : vector<8x64xi1>, vector<8x64xf32>
    %338 = arith.truncf %336 : vector<8x64xf32> to vector<8x64xbf16>
    %cst_91 = arith.constant dense<0.000000e+00> : vector<8x256xf32>
    %339 = tpu.matmul %338, %225, %cst_91 {dimension_numbers = #tpu.dot_dimension_numbers<[1], [0], [0], [1], [0, 0, 1, 1], [], []>} : vector<8x64xbf16>, vector<64x256xbf16>, vector<8x256xf32> -> vector<8x256xf32>
    %c40_92 = arith.constant 40 : index
    %c0_93 = arith.constant 0 : index
    %340 = vector.load %arg11[%c40_92, %c0_93] : memref<64x256xf32, #tpu.memory_space<vmem>>, vector<8x256xf32>
    %341 = arith.addf %339, %340 : vector<8x256xf32>
    %342 = vector.extract_strided_slice %341 {offsets = [0, 0], sizes = [8, 192], strides = [1, 1]} : vector<8x256xf32> to vector<8x192xf32>
    %343 = arith.negf %342 : vector<8x192xf32>
    %344 = math.exp %343 : vector<8x192xf32>
    %cst_94 = arith.constant 1.000000e+00 : f32
    %345 = vector.broadcast %cst_94 : f32 to vector<8x192xf32>
    %346 = arith.addf %345, %344 : vector<8x192xf32>
    %347 = arith.divf %345, %346 : vector<8x192xf32>
    %348 = vector.extract_strided_slice %341 {offsets = [0, 192], sizes = [8, 64], strides = [1, 1]} : vector<8x256xf32> to vector<8x64xf32>
    %349 = math.tanh %348 : vector<8x64xf32>
    %350 = vector.extract_strided_slice %347 {offsets = [0, 0], sizes = [8, 64], strides = [1, 1]} : vector<8x192xf32> to vector<8x64xf32>
    %351 = vector.extract_strided_slice %347 {offsets = [0, 64], sizes = [8, 64], strides = [1, 1]} : vector<8x192xf32> to vector<8x64xf32>
    %352 = vector.extract_strided_slice %347 {offsets = [0, 128], sizes = [8, 64], strides = [1, 1]} : vector<8x192xf32> to vector<8x64xf32>
    %353 = arith.mulf %351, %337 : vector<8x64xf32>
    %354 = arith.mulf %350, %349 : vector<8x64xf32>
    %355 = arith.addf %353, %354 : vector<8x64xf32>
    %356 = math.tanh %355 : vector<8x64xf32>
    %357 = arith.mulf %352, %356 : vector<8x64xf32>
    %358 = arith.select %17, %357, %336 : vector<8x64xi1>, vector<8x64xf32>
    %359 = arith.select %17, %355, %337 : vector<8x64xi1>, vector<8x64xf32>
    %360 = arith.truncf %358 : vector<8x64xf32> to vector<8x64xbf16>
    %cst_95 = arith.constant dense<0.000000e+00> : vector<8x256xf32>
    %361 = tpu.matmul %360, %225, %cst_95 {dimension_numbers = #tpu.dot_dimension_numbers<[1], [0], [0], [1], [0, 0, 1, 1], [], []>} : vector<8x64xbf16>, vector<64x256xbf16>, vector<8x256xf32> -> vector<8x256xf32>
    %c48_96 = arith.constant 48 : index
    %c0_97 = arith.constant 0 : index
    %362 = vector.load %arg11[%c48_96, %c0_97] : memref<64x256xf32, #tpu.memory_space<vmem>>, vector<8x256xf32>
    %363 = arith.addf %361, %362 : vector<8x256xf32>
    %364 = vector.extract_strided_slice %363 {offsets = [0, 0], sizes = [8, 192], strides = [1, 1]} : vector<8x256xf32> to vector<8x192xf32>
    %365 = arith.negf %364 : vector<8x192xf32>
    %366 = math.exp %365 : vector<8x192xf32>
    %cst_98 = arith.constant 1.000000e+00 : f32
    %367 = vector.broadcast %cst_98 : f32 to vector<8x192xf32>
    %368 = arith.addf %367, %366 : vector<8x192xf32>
    %369 = arith.divf %367, %368 : vector<8x192xf32>
    %370 = vector.extract_strided_slice %363 {offsets = [0, 192], sizes = [8, 64], strides = [1, 1]} : vector<8x256xf32> to vector<8x64xf32>
    %371 = math.tanh %370 : vector<8x64xf32>
    %372 = vector.extract_strided_slice %369 {offsets = [0, 0], sizes = [8, 64], strides = [1, 1]} : vector<8x192xf32> to vector<8x64xf32>
    %373 = vector.extract_strided_slice %369 {offsets = [0, 64], sizes = [8, 64], strides = [1, 1]} : vector<8x192xf32> to vector<8x64xf32>
    %374 = vector.extract_strided_slice %369 {offsets = [0, 128], sizes = [8, 64], strides = [1, 1]} : vector<8x192xf32> to vector<8x64xf32>
    %375 = arith.mulf %373, %359 : vector<8x64xf32>
    %376 = arith.mulf %372, %371 : vector<8x64xf32>
    %377 = arith.addf %375, %376 : vector<8x64xf32>
    %378 = math.tanh %377 : vector<8x64xf32>
    %379 = arith.mulf %374, %378 : vector<8x64xf32>
    %380 = arith.select %20, %379, %358 : vector<8x64xi1>, vector<8x64xf32>
    %381 = arith.select %20, %377, %359 : vector<8x64xi1>, vector<8x64xf32>
    %382 = arith.truncf %380 : vector<8x64xf32> to vector<8x64xbf16>
    %cst_99 = arith.constant dense<0.000000e+00> : vector<8x256xf32>
    %383 = tpu.matmul %382, %225, %cst_99 {dimension_numbers = #tpu.dot_dimension_numbers<[1], [0], [0], [1], [0, 0, 1, 1], [], []>} : vector<8x64xbf16>, vector<64x256xbf16>, vector<8x256xf32> -> vector<8x256xf32>
    %c56_100 = arith.constant 56 : index
    %c0_101 = arith.constant 0 : index
    %384 = vector.load %arg11[%c56_100, %c0_101] : memref<64x256xf32, #tpu.memory_space<vmem>>, vector<8x256xf32>
    %385 = arith.addf %383, %384 : vector<8x256xf32>
    %386 = vector.extract_strided_slice %385 {offsets = [0, 0], sizes = [8, 192], strides = [1, 1]} : vector<8x256xf32> to vector<8x192xf32>
    %387 = arith.negf %386 : vector<8x192xf32>
    %388 = math.exp %387 : vector<8x192xf32>
    %cst_102 = arith.constant 1.000000e+00 : f32
    %389 = vector.broadcast %cst_102 : f32 to vector<8x192xf32>
    %390 = arith.addf %389, %388 : vector<8x192xf32>
    %391 = arith.divf %389, %390 : vector<8x192xf32>
    %392 = vector.extract_strided_slice %385 {offsets = [0, 192], sizes = [8, 64], strides = [1, 1]} : vector<8x256xf32> to vector<8x64xf32>
    %393 = math.tanh %392 : vector<8x64xf32>
    %394 = vector.extract_strided_slice %391 {offsets = [0, 0], sizes = [8, 64], strides = [1, 1]} : vector<8x192xf32> to vector<8x64xf32>
    %395 = vector.extract_strided_slice %391 {offsets = [0, 64], sizes = [8, 64], strides = [1, 1]} : vector<8x192xf32> to vector<8x64xf32>
    %396 = vector.extract_strided_slice %391 {offsets = [0, 128], sizes = [8, 64], strides = [1, 1]} : vector<8x192xf32> to vector<8x64xf32>
    %397 = arith.mulf %395, %381 : vector<8x64xf32>
    %398 = arith.mulf %394, %393 : vector<8x64xf32>
    %399 = arith.addf %397, %398 : vector<8x64xf32>
    %400 = math.tanh %399 : vector<8x64xf32>
    %401 = arith.mulf %396, %400 : vector<8x64xf32>
    %402 = arith.select %23, %401, %380 : vector<8x64xi1>, vector<8x64xf32>
    %c0_103 = arith.constant 0 : index
    %c0_104 = arith.constant 0 : index
    %403 = vector.load %arg8[%c0_103, %c0_104] : memref<1x64xf32, #tpu.memory_space<vmem>>, vector<1x64xf32>
    %404 = vector.broadcast %403 : vector<1x64xf32> to vector<8x64xf32>
    %405 = arith.mulf %402, %404 : vector<8x64xf32>
    %cst_105 = arith.constant dense<0.000000e+00> : vector<8xf32>
    %406 = vector.multi_reduction <add>, %405, %cst_105 [1] : vector<8x64xf32> to vector<8xf32>
    %407 = vector.shape_cast %406 : vector<8xf32> to vector<8x1xf32>
    %c0_106 = arith.constant 0 : index
    %c0_107 = arith.constant 0 : index
    %408 = vector.load %arg9[%c0_106, %c0_107] : memref<1x1xf32, #tpu.memory_space<vmem>>, vector<1x1xf32>
    %409 = vector.broadcast %408 : vector<1x1xf32> to vector<8x1xf32>
    %410 = arith.addf %407, %409 : vector<8x1xf32>
    %411 = vector.extract_strided_slice %410 {offsets = [0, 0], sizes = [2, 1], strides = [1, 1]} : vector<8x1xf32> to vector<2x1xf32>
    %c0_108 = arith.constant 0 : index
    %c0_109 = arith.constant 0 : index
    %412 = vector.load %arg10[%c0_108, %c0_109] : memref<2x1xf32, #tpu.memory_space<vmem>>, vector<2x1xf32>
    tpu.vector_store %arg10[%c0_108, %c0_109], %411 {strides = array<i32>} : memref<2x1xf32, #tpu.memory_space<vmem>>, vector<2x1xf32>,
    return
  }
}

</mosaic_0001>

<llo_original>
// kernel: tpu_custom_call.1
$region0: #{tpu_custom_call.1}
  #allocation0 [shape = 'u32[]', space=smem, size = 0x4, offset = 0x4, fixed_abs, tag = 'smem constant byte address 0x4 - core index']
  #allocation1 [shape = 'u32[72,128]{1,0:T(1,128)}', space=vmem, size = 0x9000, scoped, tag = 'internal scratch']
  #allocation2 [shape = 'f32[64,256]{1,0:T(8,128)}', space=vmem, size = 0x10000, scoped, tag = 'scratch operand']
  #allocation3 [shape = 'f32[1,1]{1,0:T(1,128)S(1)}', space=vmem, size = 0x200, scoped, tag = 'scoped memory for tpu_custom_call.1']
  %s0 = inlined_call_operand.hbm [shape: f32[64,64], index: 0, kind: input, shape index: {}]
  %s1 = inlined_call_operand.hbm [shape: bf16[64,64], index: 1, kind: input, shape index: {}]
  %s2 = inlined_call_operand.hbm [shape: bf16[64,256], index: 2, kind: input, shape index: {}]
  %s3 = inlined_call_operand.hbm [shape: bf16[64,256], index: 3, kind: input, shape index: {}]
  %s4 = inlined_call_operand.vmem [shape: f32[1,256], index: 4, kind: input, shape index: {}]
  %s5 = inlined_call_operand.hbm [shape: bf16[128,256], index: 5, kind: input, shape index: {}]
  %s6 = inlined_call_operand.hbm [shape: bf16[64,256], index: 6, kind: input, shape index: {}]
  %s7 = inlined_call_operand.vmem [shape: f32[1,256], index: 7, kind: input, shape index: {}]
  %s8 = inlined_call_operand.vmem [shape: f32[1,64], index: 8, kind: input, shape index: {}]
  %s9 = inlined_call_operand.<no memory space> [shape: f32[1,1], index: 9, kind: input, shape index: {}]
  %s10 = inlined_call_operand.vmem [shape: f32[2,1], index: 10, kind: output, shape index: {}]
  %s11 = sld [smem:[#allocation0]]
  $region74: #{tpu_custom_call.1} parent=0
    _
  %s13 = ssub.s32 1, %s11
  %s14 = scalar_select 0, %s13, %s11
  %v15 = vstv %s9
  %16 = vst [vmem:[#allocation3] sm:$0x1] %v15
  $region1: #{tpu_custom_call.1} parent=0
    #allocation4 [shape = 'u8[32768]{0}', space=vmem, size = 0x8000, scoped, tag = 'input window, operand 0, single buffered']
    #allocation5 [shape = 's32[1]{0}', space=sflag, size = 0x4, scoped, tag = 'scoped memory for tpu_custom_call.1']
    #allocation6 [shape = 'u8[16384]{0}', space=vmem, size = 0x4000, scoped, tag = 'input window, operand 1, single buffered']
    #allocation7 [shape = 's32[1]{0}', space=sflag, size = 0x4, scoped, tag = 'scoped memory for tpu_custom_call.1']
    #allocation8 [shape = 'u8[32768]{0}', space=vmem, size = 0x8000, scoped, tag = 'input window, operand 2, single buffered']
    #allocation9 [shape = 'u8[32768]{0}', space=vmem, size = 0x8000, scoped, tag = 'input window, operand 3, single buffered']
    #allocation10 [shape = 's32[1]{0}', space=sflag, size = 0x4, scoped, tag = 'scoped memory for tpu_custom_call.1']
    #allocation11 [shape = 'u8[65536]{0}', space=vmem, size = 0x10000, scoped, tag = 'input window, operand 5, single buffered']
    #allocation12 [shape = 'u8[32768]{0}', space=vmem, size = 0x8000, scoped, tag = 'input window, operand 6, single buffered']
    #allocation13 [shape = 's32[1]{0}', space=sflag, size = 0x4, scoped, tag = 'scoped memory for tpu_custom_call.1']
    %17 = vsyncpa [#allocation5], 0
    %18 = vsyncpa [#allocation7], 0
    %19 = vsyncpa [#allocation10], 0
    %20 = vsyncpa [#allocation13], 0
    // Predicated region
    $region2: #{tpu_custom_call.1} parent=1 // pred_check
      _
    $region3: #{tpu_custom_call.1} parent=1 // pred_check_branch
      %22 = sbr.rel (0) target = $region5
    $region4: #{tpu_custom_call.1} parent=1 // pred_region
      %24 = vsyncadd [#allocation5], 0
      %s25 = sshll.u32 %s0, 4
      %s26 = int_to_ptr.hbm [resolvable:$true] %s25
      %s27 = sshll.u32 [#allocation4], 4
      %s28 = int_to_ptr.vmem [resolvable:$true] %s27
      %33 = dma.hbm_to_vmem [thread:$0]  %s26, 1024, %s28, [#allocation5], 128, 128, 8
    $region5: #{tpu_custom_call.1} parent=1 // pred_fallthru
      _
    // Predicated region
    $region6: #{tpu_custom_call.1} parent=1 // pred_check
      _
    $region7: #{tpu_custom_call.1} parent=1 // pred_check_branch
      %35 = sbr.rel (0) target = $region9
    $region8: #{tpu_custom_call.1} parent=1 // pred_region
      %37 = vsyncadd [#allocation7], 0
      %s38 = sshll.u32 %s1, 4
      %s39 = int_to_ptr.hbm [resolvable:$true] %s38
      %s40 = sshll.u32 [#allocation6], 4
      %s41 = int_to_ptr.vmem [resolvable:$true] %s40
      %46 = dma.hbm_to_vmem [thread:$0]  %s39, 512, %s41, [#allocation7], 64, 64, 4
    $region9: #{tpu_custom_call.1} parent=1 // pred_fallthru
      _
    // Predicated region
    $region10: #{tpu_custom_call.1} parent=1 // pred_check
      _
    $region11: #{tpu_custom_call.1} parent=1 // pred_check_branch
      %48 = sbr.rel (0) target = $region13
    $region12: #{tpu_custom_call.1} parent=1 // pred_region
      %50 = vsyncadd [#allocation7], 0
      %s51 = sshll.u32 %s2, 4
      %s52 = int_to_ptr.hbm [resolvable:$true] %s51
      %s53 = sshll.u32 [#allocation8], 4
      %s54 = int_to_ptr.vmem [resolvable:$true] %s53
      %59 = dma.hbm_to_vmem [thread:$0]  %s52, 1024, %s54, [#allocation7], 128, 128, 8
    $region13: #{tpu_custom_call.1} parent=1 // pred_fallthru
      _
    // Predicated region
    $region14: #{tpu_custom_call.1} parent=1 // pred_check
      _
    $region15: #{tpu_custom_call.1} parent=1 // pred_check_branch
      %61 = sbr.rel (0) target = $region17
    $region16: #{tpu_custom_call.1} parent=1 // pred_region
      %63 = vsyncadd [#allocation10], 0
      %s64 = sshll.u32 %s3, 4
      %s65 = int_to_ptr.hbm [resolvable:$true] %s64
      %s66 = sshll.u32 [#allocation9], 4
      %s67 = int_to_ptr.vmem [resolvable:$true] %s66
      %72 = dma.hbm_to_vmem [thread:$0]  %s65, 1024, %s67, [#allocation10], 128, 128, 8
    $region17: #{tpu_custom_call.1} parent=1 // pred_fallthru
      _
    // Predicated region
    $region18: #{tpu_custom_call.1} parent=1 // pred_check
      _
    $region19: #{tpu_custom_call.1} parent=1 // pred_check_branch
      %74 = sbr.rel (0) target = $region21
    $region20: #{tpu_custom_call.1} parent=1 // pred_region
      _
    $region21: #{tpu_custom_call.1} parent=1 // pred_fallthru
      _
    // Predicated region
    $region22: #{tpu_custom_call.1} parent=1 // pred_check
      _
    $region23: #{tpu_custom_call.1} parent=1 // pred_check_branch
      %76 = sbr.rel (0) target = $region25
    $region24: #{tpu_custom_call.1} parent=1 // pred_region
      %78 = vsyncadd [#allocation10], 0
      %s79 = sshll.u32 %s5, 4
      %s80 = int_to_ptr.hbm [resolvable:$true] %s79
      %s81 = sshll.u32 [#allocation11], 4
      %s82 = int_to_ptr.vmem [resolvable:$true] %s81
      %87 = dma.hbm_to_vmem [thread:$0]  %s80, 2048, %s82, [#allocation10], 128, 128, 8
    $region25: #{tpu_custom_call.1} parent=1 // pred_fallthru
      _
    // Predicated region
    $region26: #{tpu_custom_call.1} parent=1 // pred_check
      _
    $region27: #{tpu_custom_call.1} parent=1 // pred_check_branch
      %89 = sbr.rel (0) target = $region29
    $region28: #{tpu_custom_call.1} parent=1 // pred_region
      %91 = vsyncadd [#allocation13], 0
      %s92 = sshll.u32 %s6, 4
      %s93 = int_to_ptr.hbm [resolvable:$true] %s92
      %s94 = sshll.u32 [#allocation12], 4
      %s95 = int_to_ptr.vmem [resolvable:$true] %s94
      %100 = dma.hbm_to_vmem [thread:$0]  %s93, 1024, %s95, [#allocation13], 128, 128, 8
    $region29: #{tpu_custom_call.1} parent=1 // pred_fallthru
      _
    // Predicated region
    $region30: #{tpu_custom_call.1} parent=1 // pred_check
      _
    $region31: #{tpu_custom_call.1} parent=1 // pred_check_branch
      %102 = sbr.rel (0) target = $region33
    $region32: #{tpu_custom_call.1} parent=1 // pred_region
      _
    $region33: #{tpu_custom_call.1} parent=1 // pred_fallthru
      _
    // Predicated region
    $region34: #{tpu_custom_call.1} parent=1 // pred_check
      _
    $region35: #{tpu_custom_call.1} parent=1 // pred_check_branch
      %104 = sbr.rel (0) target = $region37
    $region36: #{tpu_custom_call.1} parent=1 // pred_region
      _
    $region37: #{tpu_custom_call.1} parent=1 // pred_fallthru
      _
    // Predicated region
    $region38: #{tpu_custom_call.1} parent=1 // pred_check
      _
    $region39: #{tpu_custom_call.1} parent=1 // pred_check_branch
      %106 = sbr.rel (0) target = $region41
    $region40: #{tpu_custom_call.1} parent=1 // pred_region
      _
    $region41: #{tpu_custom_call.1} parent=1 // pred_fallthru
      _
    // Predicated region
    $region42: #{tpu_custom_call.1} parent=1 // pred_check
      _
    $region43: #{tpu_custom_call.1} parent=1 // pred_check_branch
      %108 = sbr.rel (0) target = $region45
    $region44: #{tpu_custom_call.1} parent=1 // pred_region
      %110 = dma.done [#allocation5], 1024
    $region45: #{tpu_custom_call.1} parent=1 // pred_fallthru
      _
    // Predicated region
    $region46: #{tpu_custom_call.1} parent=1 // pred_check
      _
    $region47: #{tpu_custom_call.1} parent=1 // pred_check_branch
      %112 = sbr.rel (0) target = $region49
    $region48: #{tpu_custom_call.1} parent=1 // pred_region
      %114 = dma.done [#allocation7], 512
    $region49: #{tpu_custom_call.1} parent=1 // pred_fallthru
      _
    // Predicated region
    $region50: #{tpu_custom_call.1} parent=1 // pred_check
      _
    $region51: #{tpu_custom_call.1} parent=1 // pred_check_branch
      %116 = sbr.rel (0) target = $region53
    $region52: #{tpu_custom_call.1} parent=1 // pred_region
      %118 = dma.done [#allocation7], 1024
    $region53: #{tpu_custom_call.1} parent=1 // pred_fallthru
      _
    // Predicated region
    $region54: #{tpu_custom_call.1} parent=1 // pred_check
      _
    $region55: #{tpu_custom_call.1} parent=1 // pred_check_branch
      %120 = sbr.rel (0) target = $region57
    $region56: #{tpu_custom_call.1} parent=1 // pred_region
      %122 = dma.done [#allocation10], 1024
    $region57: #{tpu_custom_call.1} parent=1 // pred_fallthru
      _
    // Predicated region
    $region58: #{tpu_custom_call.1} parent=1 // pred_check
      _
    $region59: #{tpu_custom_call.1} parent=1 // pred_check_branch
      %124 = sbr.rel (0) target = $region61
    $region60: #{tpu_custom_call.1} parent=1 // pred_region
      %126 = dma.done [#allocation10], 2048
    $region61: #{tpu_custom_call.1} parent=1 // pred_fallthru
      _
    // Predicated region
    $region62: #{tpu_custom_call.1} parent=1 // pred_check
      _
    $region63: #{tpu_custom_call.1} parent=1 // pred_check_branch
      %128 = sbr.rel (0) target = $region65
    $region64: #{tpu_custom_call.1} parent=1 // pred_region
      %130 = dma.done [#allocation13], 1024
    $region65: #{tpu_custom_call.1} parent=1 // pred_fallthru
      _
    %v132 = vld [vmem:[#allocation4] sm:$0xff]
    %vm133 = vcmp.gt.f32.partialorder %v132, 0.0
    %v134 = vld [vmem:[#allocation4 + $0x8] sm:$0xff]
    %vm135 = vcmp.gt.f32.partialorder %v134, 0.0
    %v136 = vld [vmem:[#allocation4 + $0x10] sm:$0xff]
    %vm137 = vcmp.gt.f32.partialorder %v136, 0.0
    %v138 = vld [vmem:[#allocation4 + $0x18] sm:$0xff]
    %vm139 = vcmp.gt.f32.partialorder %v138, 0.0
    %v140 = vld [vmem:[#allocation4 + $0x20] sm:$0xff]
    %vm141 = vcmp.gt.f32.partialorder %v140, 0.0
    %v142 = vld [vmem:[#allocation4 + $0x28] sm:$0xff]
    %vm143 = vcmp.gt.f32.partialorder %v142, 0.0
    %v144 = vld [vmem:[#allocation4 + $0x30] sm:$0xff]
    %vm145 = vcmp.gt.f32.partialorder %v144, 0.0
    %v146 = vld [vmem:[#allocation4 + $0x38] sm:$0xff]
    %vm147 = vcmp.gt.f32.partialorder %v146, 0.0
    %v148 = vld [vmem:[#allocation6] sm:$0xf]
    %v149 = vld [vmem:[#allocation6 + $0x4] sm:$0xf]
    %v150 = vld [vmem:[#allocation6 + $0x8] sm:$0xf]
    %v151 = vld [vmem:[#allocation6 + $0xc] sm:$0xf]
    %v152 = vld [vmem:[#allocation6 + $0x10] sm:$0xf]
    %v153 = vld [vmem:[#allocation6 + $0x14] sm:$0xf]
    %v154 = vld [vmem:[#allocation6 + $0x18] sm:$0xf]
    %v155 = vld [vmem:[#allocation6 + $0x1c] sm:$0xf]
    %v156 = vld [vmem:[#allocation8] sm:$0xff]
    %v157 = vld [vmem:[#allocation8 + $0x8] sm:$0xff]
    %v158 = vld [vmem:[#allocation8 + $0x10] sm:$0xff]
    %v159 = vld [vmem:[#allocation8 + $0x18] sm:$0xff]
    %v160 = vld [vmem:[#allocation8 + $0x20] sm:$0xff]
    %v161 = vld [vmem:[#allocation8 + $0x28] sm:$0xff]
    %v162 = vld [vmem:[#allocation8 + $0x30] sm:$0xff]
    %v163 = vld [vmem:[#allocation8 + $0x38] sm:$0xff]
    %v164 = vld [vmem:[%s4] sm:$0x3]
    %v166 = vperm.slane %v164, 0
    %v167 = vperm.slane %v164, 1
    %v178 = vunpack.c.l.b16 %v148
    %v179 = vunpack.c.l.b16 %v149
    %v180 = vunpack.c.l.b16 %v150
    %v181 = vunpack.c.l.b16 %v151
    %v182 = vunpack.c.l.b16 %v152
    %v183 = vunpack.c.l.b16 %v153
    %v184 = vunpack.c.l.b16 %v154
    %v185 = vunpack.c.l.b16 %v155
    %v186 = vpack.c.b16 %v179, %v178
    %v187 = vpack.c.b16 %v181, %v180
    %v188 = vpack.c.b16 %v183, %v182
    %v189 = vpack.c.b16 %v185, %v184
    %v198 = vunpack.c.l.b16 %v156
    %v199 = vunpack.c.h.b16 %v156
    %v200 = vunpack.c.l.b16 %v157
    %v201 = vunpack.c.h.b16 %v157
    %v202 = vunpack.c.l.b16 %v158
    %v203 = vunpack.c.h.b16 %v158
    %v204 = vunpack.c.l.b16 %v159
    %v205 = vunpack.c.h.b16 %v159
    %v206 = vunpack.c.l.b16 %v160
    %v207 = vunpack.c.h.b16 %v160
    %v208 = vunpack.c.l.b16 %v161
    %v209 = vunpack.c.h.b16 %v161
    %v210 = vunpack.c.l.b16 %v162
    %v211 = vunpack.c.h.b16 %v162
    %v212 = vunpack.c.l.b16 %v163
    %v213 = vunpack.c.h.b16 %v163
    %v214 = vpack.c.b16 %v200, %v198
    %v215 = vpack.c.b16 %v201, %v199
    %v216 = vpack.c.b16 %v204, %v202
    %v217 = vpack.c.b16 %v205, %v203
    %v218 = vpack.c.b16 %v208, %v206
    %v219 = vpack.c.b16 %v209, %v207
    %v220 = vpack.c.b16 %v212, %v210
    %v221 = vpack.c.b16 %v213, %v211
    %vm230 = vcmask 523264
    %v232 = vsel %vm230, %v186, 0
    %v235 = vsel %vm230, %v187, 0
    %v238 = vsel %vm230, %v188, 0
    %v241 = vsel %vm230, %v189, 0
    %243 = vmatpush.bf16.msra.mxu0 0
    %244 = vmatpush.bf16.msra.mxu0 0
    %245 = vmatpush.bf16.msra.mxu0 0
    %246 = vmatpush.bf16.msra.mxu0 0
    %247 = vmatpush.bf16.msra.mxu0 %v220
    %248 = vmatpush.bf16.msra.mxu0 %v218
    %249 = vmatpush.bf16.msra.mxu0 %v216
    %250 = vmatpush.bf16.msra.mxu0 %v214
    %251 = vmatmul.bf16.gmra.mxu0 %v232
    %v252 = vpop.f32.mrf.mxu0
    %v253 = vadd.f32 %v166, %v252
    %v254 = vpop.f32.mrf.mxu0
    %v255 = vadd.f32 %v166, %v254
    %256 = vmatmul.bf16.gmra.mxu0 %v235
    %v257 = vpop.f32.mrf.mxu0
    %v258 = vadd.f32 %v166, %v257
    %v259 = vpop.f32.mrf.mxu0
    %v260 = vadd.f32 %v166, %v259
    %261 = vmatmul.bf16.gmra.mxu0 %v238
    %v262 = vpop.f32.mrf.mxu0
    %v263 = vadd.f32 %v166, %v262
    %v264 = vpop.f32.mrf.mxu0
    %v265 = vadd.f32 %v166, %v264
    %266 = vmatmul.bf16.gmra.mxu0 %v241
    %v267 = vpop.f32.mrf.mxu0
    %v268 = vadd.f32 %v166, %v267
    %v269 = vpop.f32.mrf.mxu0
    %v270 = vadd.f32 %v166, %v269
    %271 = vdwg.mxu0
    %272 = vmatpush.bf16.msra.mxu0 0
    %273 = vmatpush.bf16.msra.mxu0 0
    %274 = vmatpush.bf16.msra.mxu0 0
    %275 = vmatpush.bf16.msra.mxu0 0
    %276 = vmatpush.bf16.msra.mxu0 %v221
    %277 = vmatpush.bf16.msra.mxu0 %v219
    %278 = vmatpush.bf16.msra.mxu0 %v217
    %279 = vmatpush.bf16.msra.mxu0 %v215
    %280 = vmatmul.bf16.gmra.mxu0 %v232
    %v281 = vpop.f32.mrf.mxu0
    %v282 = vadd.f32 %v167, %v281
    %v283 = vpop.f32.mrf.mxu0
    %v284 = vadd.f32 %v167, %v283
    %285 = vmatmul.bf16.gmra.mxu0 %v235
    %v286 = vpop.f32.mrf.mxu0
    %v287 = vadd.f32 %v167, %v286
    %v288 = vpop.f32.mrf.mxu0
    %v289 = vadd.f32 %v167, %v288
    %290 = vmatmul.bf16.gmra.mxu0 %v238
    %v291 = vpop.f32.mrf.mxu0
    %v292 = vadd.f32 %v167, %v291
    %v293 = vpop.f32.mrf.mxu0
    %v294 = vadd.f32 %v167, %v293
    %295 = vmatmul.bf16.gmra.mxu0 %v241
    %v296 = vpop.f32.mrf.mxu0
    %v297 = vadd.f32 %v167, %v296
    %v298 = vpop.f32.mrf.mxu0
    %v299 = vadd.f32 %v167, %v298
    %300 = vdwg.mxu0
    %301 = vst [vmem:[#allocation2] sm:$0xff] %v253
    %302 = vst [vmem:[#allocation2 + $0x8] sm:$0xff] %v282
    %303 = vst [vmem:[#allocation2 + $0x10] sm:$0xff] %v255
    %304 = vst [vmem:[#allocation2 + $0x18] sm:$0xff] %v284
    %305 = vst [vmem:[#allocation2 + $0x20] sm:$0xff] %v258
    %306 = vst [vmem:[#allocation2 + $0x28] sm:$0xff] %v287
    %307 = vst [vmem:[#allocation2 + $0x30] sm:$0xff] %v260
    %308 = vst [vmem:[#allocation2 + $0x38] sm:$0xff] %v289
    %309 = vst [vmem:[#allocation2 + $0x40] sm:$0xff] %v263
    %310 = vst [vmem:[#allocation2 + $0x48] sm:$0xff] %v292
    %311 = vst [vmem:[#allocation2 + $0x50] sm:$0xff] %v265
    %312 = vst [vmem:[#allocation2 + $0x58] sm:$0xff] %v294
    %313 = vst [vmem:[#allocation2 + $0x60] sm:$0xff] %v268
    %314 = vst [vmem:[#allocation2 + $0x68] sm:$0xff] %v297
    %315 = vst [vmem:[#allocation2 + $0x70] sm:$0xff] %v270
    %316 = vst [vmem:[#allocation2 + $0x78] sm:$0xff] %v299
    %v317 = vld [vmem:[#allocation9] sm:$0xff]
    %v318 = vld [vmem:[#allocation9 + $0x8] sm:$0xff]
    %v319 = vld [vmem:[#allocation9 + $0x10] sm:$0xff]
    %v320 = vld [vmem:[#allocation9 + $0x18] sm:$0xff]
    %v321 = vld [vmem:[#allocation9 + $0x20] sm:$0xff]
    %v322 = vld [vmem:[#allocation9 + $0x28] sm:$0xff]
    %v323 = vld [vmem:[#allocation9 + $0x30] sm:$0xff]
    %v324 = vld [vmem:[#allocation9 + $0x38] sm:$0xff]
    %v325 = vld [vmem:[#allocation2] sm:$0xff]
    %v326 = vld [vmem:[#allocation2 + $0x8] sm:$0xff]
    %v335 = vunpack.c.l.b16 %v317
    %v336 = vunpack.c.h.b16 %v317
    %v337 = vunpack.c.l.b16 %v318
    %v338 = vunpack.c.h.b16 %v318
    %v339 = vunpack.c.l.b16 %v319
    %v340 = vunpack.c.h.b16 %v319
    %v341 = vunpack.c.l.b16 %v320
    %v342 = vunpack.c.h.b16 %v320
    %v343 = vunpack.c.l.b16 %v321
    %v344 = vunpack.c.h.b16 %v321
    %v345 = vunpack.c.l.b16 %v322
    %v346 = vunpack.c.h.b16 %v322
    %v347 = vunpack.c.l.b16 %v323
    %v348 = vunpack.c.h.b16 %v323
    %v349 = vunpack.c.l.b16 %v324
    %v350 = vunpack.c.h.b16 %v324
    %v351 = vpack.c.b16 %v337, %v335
    %v352 = vpack.c.b16 %v338, %v336
    %v353 = vpack.c.b16 %v341, %v339
    %v354 = vpack.c.b16 %v342, %v340
    %v355 = vpack.c.b16 %v345, %v343
    %v356 = vpack.c.b16 %v346, %v344
    %v357 = vpack.c.b16 %v349, %v347
    %v358 = vpack.c.b16 %v350, %v348
    %v368 = vsel %vm230, 0, 0
    %370 = vmatpush.bf16.msra.mxu0 0
    %371 = vmatpush.bf16.msra.mxu0 0
    %372 = vmatpush.bf16.msra.mxu0 0
    %373 = vmatpush.bf16.msra.mxu0 0
    %374 = vmatpush.bf16.msra.mxu0 %v357
    %375 = vmatpush.bf16.msra.mxu0 %v355
    %376 = vmatpush.bf16.msra.mxu0 %v353
    %377 = vmatpush.bf16.msra.mxu0 %v351
    %378 = vmatmul.bf16.gmra.mxu0 %v368
    %v379 = vpop.f32.mrf.mxu0
    %v380 = vadd.f32 %v325, %v379
    %v381 = vpop.f32.mrf.mxu0
    %382 = vdwg.mxu0
    %383 = vmatpush.bf16.msra.mxu0 0
    %384 = vmatpush.bf16.msra.mxu0 0
    %385 = vmatpush.bf16.msra.mxu0 0
    %386 = vmatpush.bf16.msra.mxu0 0
    %387 = vmatpush.bf16.msra.mxu0 %v358
    %388 = vmatpush.bf16.msra.mxu0 %v356
    %389 = vmatpush.bf16.msra.mxu0 %v354
    %390 = vmatpush.bf16.msra.mxu0 %v352
    %391 = vmatmul.bf16.gmra.mxu0 %v368
    %v392 = vpop.f32.mrf.mxu0
    %v393 = vadd.f32 %v326, %v392
    %v394 = vpop.f32.mrf.mxu0
    %395 = vdwg.mxu0
    %v396 = vxor.u32 %v380, 2147483648
    %v397 = vxor.u32 %v393, 2147483648
    %v398 = vmul.f32 %v396, 1.442695
    %v399 = vpow.pop %v398
    %v400 = vmul.f32 %v397, 1.442695
    %v401 = vpow.pop %v400
    %v402 = vadd.f32 %v399, 1.0
    %v403 = vadd.f32 %v401, 1.0
    %v404 = vrcp.pop %v402
    %v405 = vmul.f32 %v402, %v404
    %v406 = vsub.f32 1.0, %v405
    %v407 = vmul.f32 %v404, %v406
    %v408 = vadd.f32 %v404, %v407
    %vm409 = vweird.f32 %v402
    %vm410 = vweird.f32 %v404
    %vm411 = vmor %vm409, %vm410
    %v412 = vsel %vm411, %v404, %v408
    %v413 = vand.u32 2147483647, %v402
    %vm414 = vcmp.eq.f32.partialorder %v413, 8.507059e+37
    %v415 = vand.u32 %v402, 2147483648
    %v416 = vor.u32 1.1754944e-38, %v415
    %v417 = vsel %vm414, %v416, %v412
    %v418 = vmul.f32 1.0, %v417
    %v419 = vrcp.pop %v403
    %v420 = vmul.f32 %v403, %v419
    %v421 = vsub.f32 1.0, %v420
    %v422 = vmul.f32 %v419, %v421
    %v423 = vadd.f32 %v419, %v422
    %vm424 = vweird.f32 %v403
    %vm425 = vweird.f32 %v419
    %vm426 = vmor %vm424, %vm425
    %v427 = vsel %vm426, %v419, %v423
    %v428 = vand.u32 2147483647, %v403
    %vm429 = vcmp.eq.f32.partialorder %v428, 8.507059e+37
    %v430 = vand.u32 %v403, 2147483648
    %v431 = vor.u32 1.1754944e-38, %v430
    %v432 = vsel %vm429, %v431, %v427
    %v433 = vmul.f32 1.0, %v432
    %v434 = vtanh.pop %v393
    %v435 = vmul.f32 %v418, 0.0
    %437 = vrot.lane.b32.xlu0 %v434, 64
    %v438 = vpop.permute.xlu0 %437
    %v440 = vmul.f32 %v418, %v438
    %442 = vrot.lane.b32.xlu0 %v440, 64
    %v443 = vpop.permute.xlu0 %442
    %v445 = vadd.f32 %v435, %v443
    %v446 = vtanh.pop %v445
    %448 = vrot.lane.b32.xlu0 %v446, 64
    %v449 = vpop.permute.xlu0 %448
    %v451 = vmul.f32 %v433, %v449
    %v452 = vsel %vm133, %v451, 0.0
    %454 = vrot.lane.b32.xlu0 %v445, 64
    %v455 = vpop.permute.xlu0 %454
    %v457 = vsel %vm133, %v455, 0.0
    %v458 = vpack.c.bf16 %v452, %v452
    %v459 = vld [vmem:[#allocation2 + $0x10] sm:$0xff]
    %v460 = vld [vmem:[#allocation2 + $0x18] sm:$0xff]
    %v462 = vsel %vm230, %v458, 0
    %464 = vmatpush.bf16.msra.mxu0 0
    %465 = vmatpush.bf16.msra.mxu0 0
    %466 = vmatpush.bf16.msra.mxu0 0
    %467 = vmatpush.bf16.msra.mxu0 0
    %468 = vmatpush.bf16.msra.mxu0 %v357
    %469 = vmatpush.bf16.msra.mxu0 %v355
    %470 = vmatpush.bf16.msra.mxu0 %v353
    %471 = vmatpush.bf16.msra.mxu0 %v351
    %472 = vmatmul.bf16.gmra.mxu0 %v462
    %v473 = vpop.f32.mrf.mxu0
    %v474 = vadd.f32 %v459, %v473
    %v475 = vpop.f32.mrf.mxu0
    %476 = vdwg.mxu0
    %477 = vmatpush.bf16.msra.mxu0 0
    %478 = vmatpush.bf16.msra.mxu0 0
    %479 = vmatpush.bf16.msra.mxu0 0
    %480 = vmatpush.bf16.msra.mxu0 0
    %481 = vmatpush.bf16.msra.mxu0 %v358
    %482 = vmatpush.bf16.msra.mxu0 %v356
    %483 = vmatpush.bf16.msra.mxu0 %v354
    %484 = vmatpush.bf16.msra.mxu0 %v352
    %485 = vmatmul.bf16.gmra.mxu0 %v462
    %v486 = vpop.f32.mrf.mxu0
    %v487 = vadd.f32 %v460, %v486
    %v488 = vpop.f32.mrf.mxu0
    %489 = vdwg.mxu0
    %v490 = vxor.u32 %v474, 2147483648
    %v491 = vxor.u32 %v487, 2147483648
    %v492 = vmul.f32 %v490, 1.442695
    %v493 = vpow.pop %v492
    %v494 = vmul.f32 %v491, 1.442695
    %v495 = vpow.pop %v494
    %v496 = vadd.f32 %v493, 1.0
    %v497 = vadd.f32 %v495, 1.0
    %v498 = vrcp.pop %v496
    %v499 = vmul.f32 %v496, %v498
    %v500 = vsub.f32 1.0, %v499
    %v501 = vmul.f32 %v498, %v500
    %v502 = vadd.f32 %v498, %v501
    %vm503 = vweird.f32 %v496
    %vm504 = vweird.f32 %v498
    %vm505 = vmor %vm503, %vm504
    %v506 = vsel %vm505, %v498, %v502
    %v507 = vand.u32 2147483647, %v496
    %vm508 = vcmp.eq.f32.partialorder %v507, 8.507059e+37
    %v509 = vand.u32 %v496, 2147483648
    %v510 = vor.u32 1.1754944e-38, %v509
    %v511 = vsel %vm508, %v510, %v506
    %v512 = vmul.f32 1.0, %v511
    %v513 = vrcp.pop %v497
    %v514 = vmul.f32 %v497, %v513
    %v515 = vsub.f32 1.0, %v514
    %v516 = vmul.f32 %v513, %v515
    %v517 = vadd.f32 %v513, %v516
    %vm518 = vweird.f32 %v497
    %vm519 = vweird.f32 %v513
    %vm520 = vmor %vm518, %vm519
    %v521 = vsel %vm520, %v513, %v517
    %v522 = vand.u32 2147483647, %v497
    %vm523 = vcmp.eq.f32.partialorder %v522, 8.507059e+37
    %v524 = vand.u32 %v497, 2147483648
    %v525 = vor.u32 1.1754944e-38, %v524
    %v526 = vsel %vm523, %v525, %v521
    %v527 = vmul.f32 1.0, %v526
    %v528 = vtanh.pop %v487
    %530 = vrot.lane.b32.xlu0 %v457, 64
    %v531 = vpop.permute.xlu0 %530
    %v533 = vmul.f32 %v512, %v531
    %535 = vrot.lane.b32.xlu0 %v528, 64
    %v536 = vpop.permute.xlu0 %535
    %v538 = vmul.f32 %v512, %v536
    %540 = vrot.lane.b32.xlu0 %v538, 64
    %v541 = vpop.permute.xlu0 %540
    %v543 = vadd.f32 %v533, %v541
    %v544 = vtanh.pop %v543
    %546 = vrot.lane.b32.xlu0 %v544, 64
    %v547 = vpop.permute.xlu0 %546
    %v549 = vmul.f32 %v527, %v547
    %v550 = vsel %vm135, %v549, %v452
    %552 = vrot.lane.b32.xlu0 %v543, 64
    %v553 = vpop.permute.xlu0 %552
    %v555 = vsel %vm135, %v553, %v457
    %v556 = vpack.c.bf16 %v550, %v550
    %v557 = vld [vmem:[#allocation2 + $0x20] sm:$0xff]
    %v558 = vld [vmem:[#allocation2 + $0x28] sm:$0xff]
    %v560 = vsel %vm230, %v556, 0
    %562 = vmatpush.bf16.msra.mxu0 0
    %563 = vmatpush.bf16.msra.mxu0 0
    %564 = vmatpush.bf16.msra.mxu0 0
    %565 = vmatpush.bf16.msra.mxu0 0
    %566 = vmatpush.bf16.msra.mxu0 %v357
    %567 = vmatpush.bf16.msra.mxu0 %v355
    %568 = vmatpush.bf16.msra.mxu0 %v353
    %569 = vmatpush.bf16.msra.mxu0 %v351
    %570 = vmatmul.bf16.gmra.mxu0 %v560
    %v571 = vpop.f32.mrf.mxu0
    %v572 = vadd.f32 %v557, %v571
    %v573 = vpop.f32.mrf.mxu0
    %574 = vdwg.mxu0
    %575 = vmatpush.bf16.msra.mxu0 0
    %576 = vmatpush.bf16.msra.mxu0 0
    %577 = vmatpush.bf16.msra.mxu0 0
    %578 = vmatpush.bf16.msra.mxu0 0
    %579 = vmatpush.bf16.msra.mxu0 %v358
    %580 = vmatpush.bf16.msra.mxu0 %v356
    %581 = vmatpush.bf16.msra.mxu0 %v354
    %582 = vmatpush.bf16.msra.mxu0 %v352
    %583 = vmatmul.bf16.gmra.mxu0 %v560
    %v584 = vpop.f32.mrf.mxu0
    %v585 = vadd.f32 %v558, %v584
    %v586 = vpop.f32.mrf.mxu0
    %587 = vdwg.mxu0
    %v588 = vxor.u32 %v572, 2147483648
    %v589 = vxor.u32 %v585, 2147483648
    %v590 = vmul.f32 %v588, 1.442695
    %v591 = vpow.pop %v590
    %v592 = vmul.f32 %v589, 1.442695
    %v593 = vpow.pop %v592
    %v594 = vadd.f32 %v591, 1.0
    %v595 = vadd.f32 %v593, 1.0
    %v596 = vrcp.pop %v594
    %v597 = vmul.f32 %v594, %v596
    %v598 = vsub.f32 1.0, %v597
    %v599 = vmul.f32 %v596, %v598
    %v600 = vadd.f32 %v596, %v599
    %vm601 = vweird.f32 %v594
    %vm602 = vweird.f32 %v596
    %vm603 = vmor %vm601, %vm602
    %v604 = vsel %vm603, %v596, %v600
    %v605 = vand.u32 2147483647, %v594
    %vm606 = vcmp.eq.f32.partialorder %v605, 8.507059e+37
    %v607 = vand.u32 %v594, 2147483648
    %v608 = vor.u32 1.1754944e-38, %v607
    %v609 = vsel %vm606, %v608, %v604
    %v610 = vmul.f32 1.0, %v609
    %v611 = vrcp.pop %v595
    %v612 = vmul.f32 %v595, %v611
    %v613 = vsub.f32 1.0, %v612
    %v614 = vmul.f32 %v611, %v613
    %v615 = vadd.f32 %v611, %v614
    %vm616 = vweird.f32 %v595
    %vm617 = vweird.f32 %v611
    %vm618 = vmor %vm616, %vm617
    %v619 = vsel %vm618, %v611, %v615
    %v620 = vand.u32 2147483647, %v595
    %vm621 = vcmp.eq.f32.partialorder %v620, 8.507059e+37
    %v622 = vand.u32 %v595, 2147483648
    %v623 = vor.u32 1.1754944e-38, %v622
    %v624 = vsel %vm621, %v623, %v619
    %v625 = vmul.f32 1.0, %v624
    %v626 = vtanh.pop %v585
    %628 = vrot.lane.b32.xlu0 %v555, 64
    %v629 = vpop.permute.xlu0 %628
    %v631 = vmul.f32 %v610, %v629
    %633 = vrot.lane.b32.xlu0 %v626, 64
    %v634 = vpop.permute.xlu0 %633
    %v636 = vmul.f32 %v610, %v634
    %638 = vrot.lane.b32.xlu0 %v636, 64
    %v639 = vpop.permute.xlu0 %638
    %v641 = vadd.f32 %v631, %v639
    %v642 = vtanh.pop %v641
    %644 = vrot.lane.b32.xlu0 %v642, 64
    %v645 = vpop.permute.xlu0 %644
    %v647 = vmul.f32 %v625, %v645
    %v648 = vsel %vm137, %v647, %v550
    %650 = vrot.lane.b32.xlu0 %v641, 64
    %v651 = vpop.permute.xlu0 %650
    %v653 = vsel %vm137, %v651, %v555
    %v654 = vpack.c.bf16 %v648, %v648
    %v655 = vld [vmem:[#allocation2 + $0x30] sm:$0xff]
    %v656 = vld [vmem:[#allocation2 + $0x38] sm:$0xff]
    %v658 = vsel %vm230, %v654, 0
    %660 = vmatpush.bf16.msra.mxu0 0
    %661 = vmatpush.bf16.msra.mxu0 0
    %662 = vmatpush.bf16.msra.mxu0 0
    %663 = vmatpush.bf16.msra.mxu0 0
    %664 = vmatpush.bf16.msra.mxu0 %v357
    %665 = vmatpush.bf16.msra.mxu0 %v355
    %666 = vmatpush.bf16.msra.mxu0 %v353
    %667 = vmatpush.bf16.msra.mxu0 %v351
    %668 = vmatmul.bf16.gmra.mxu0 %v658
    %v669 = vpop.f32.mrf.mxu0
    %v670 = vadd.f32 %v655, %v669
    %v671 = vpop.f32.mrf.mxu0
    %672 = vdwg.mxu0
    %673 = vmatpush.bf16.msra.mxu0 0
    %674 = vmatpush.bf16.msra.mxu0 0
    %675 = vmatpush.bf16.msra.mxu0 0
    %676 = vmatpush.bf16.msra.mxu0 0
    %677 = vmatpush.bf16.msra.mxu0 %v358
    %678 = vmatpush.bf16.msra.mxu0 %v356
    %679 = vmatpush.bf16.msra.mxu0 %v354
    %680 = vmatpush.bf16.msra.mxu0 %v352
    %681 = vmatmul.bf16.gmra.mxu0 %v658
    %v682 = vpop.f32.mrf.mxu0
    %v683 = vadd.f32 %v656, %v682
    %v684 = vpop.f32.mrf.mxu0
    %685 = vdwg.mxu0
    %v686 = vxor.u32 %v670, 2147483648
    %v687 = vxor.u32 %v683, 2147483648
    %v688 = vmul.f32 %v686, 1.442695
    %v689 = vpow.pop %v688
    %v690 = vmul.f32 %v687, 1.442695
    %v691 = vpow.pop %v690
    %v692 = vadd.f32 %v689, 1.0
    %v693 = vadd.f32 %v691, 1.0
    %v694 = vrcp.pop %v692
    %v695 = vmul.f32 %v692, %v694
    %v696 = vsub.f32 1.0, %v695
    %v697 = vmul.f32 %v694, %v696
    %v698 = vadd.f32 %v694, %v697
    %vm699 = vweird.f32 %v692
    %vm700 = vweird.f32 %v694
    %vm701 = vmor %vm699, %vm700
    %v702 = vsel %vm701, %v694, %v698
    %v703 = vand.u32 2147483647, %v692
    %vm704 = vcmp.eq.f32.partialorder %v703, 8.507059e+37
    %v705 = vand.u32 %v692, 2147483648
    %v706 = vor.u32 1.1754944e-38, %v705
    %v707 = vsel %vm704, %v706, %v702
    %v708 = vmul.f32 1.0, %v707
    %v709 = vrcp.pop %v693
    %v710 = vmul.f32 %v693, %v709
    %v711 = vsub.f32 1.0, %v710
    %v712 = vmul.f32 %v709, %v711
    %v713 = vadd.f32 %v709, %v712
    %vm714 = vweird.f32 %v693
    %vm715 = vweird.f32 %v709
    %vm716 = vmor %vm714, %vm715
    %v717 = vsel %vm716, %v709, %v713
    %v718 = vand.u32 2147483647, %v693
    %vm719 = vcmp.eq.f32.partialorder %v718, 8.507059e+37
    %v720 = vand.u32 %v693, 2147483648
    %v721 = vor.u32 1.1754944e-38, %v720
    %v722 = vsel %vm719, %v721, %v717
    %v723 = vmul.f32 1.0, %v722
    %v724 = vtanh.pop %v683
    %726 = vrot.lane.b32.xlu0 %v653, 64
    %v727 = vpop.permute.xlu0 %726
    %v729 = vmul.f32 %v708, %v727
    %731 = vrot.lane.b32.xlu0 %v724, 64
    %v732 = vpop.permute.xlu0 %731
    %v734 = vmul.f32 %v708, %v732
    %736 = vrot.lane.b32.xlu0 %v734, 64
    %v737 = vpop.permute.xlu0 %736
    %v739 = vadd.f32 %v729, %v737
    %v740 = vtanh.pop %v739
    %742 = vrot.lane.b32.xlu0 %v740, 64
    %v743 = vpop.permute.xlu0 %742
    %v745 = vmul.f32 %v723, %v743
    %v746 = vsel %vm139, %v745, %v648
    %748 = vrot.lane.b32.xlu0 %v739, 64
    %v749 = vpop.permute.xlu0 %748
    %v751 = vsel %vm139, %v749, %v653
    %v752 = vpack.c.bf16 %v746, %v746
    %v753 = vld [vmem:[#allocation2 + $0x40] sm:$0xff]
    %v754 = vld [vmem:[#allocation2 + $0x48] sm:$0xff]
    %v756 = vsel %vm230, %v752, 0
    %758 = vmatpush.bf16.msra.mxu0 0
    %759 = vmatpush.bf16.msra.mxu0 0
    %760 = vmatpush.bf16.msra.mxu0 0
    %761 = vmatpush.bf16.msra.mxu0 0
    %762 = vmatpush.bf16.msra.mxu0 %v357
    %763 = vmatpush.bf16.msra.mxu0 %v355
    %764 = vmatpush.bf16.msra.mxu0 %v353
    %765 = vmatpush.bf16.msra.mxu0 %v351
    %766 = vmatmul.bf16.gmra.mxu0 %v756
    %v767 = vpop.f32.mrf.mxu0
    %v768 = vadd.f32 %v753, %v767
    %v769 = vpop.f32.mrf.mxu0
    %770 = vdwg.mxu0
    %771 = vmatpush.bf16.msra.mxu0 0
    %772 = vmatpush.bf16.msra.mxu0 0
    %773 = vmatpush.bf16.msra.mxu0 0
    %774 = vmatpush.bf16.msra.mxu0 0
    %775 = vmatpush.bf16.msra.mxu0 %v358
    %776 = vmatpush.bf16.msra.mxu0 %v356
    %777 = vmatpush.bf16.msra.mxu0 %v354
    %778 = vmatpush.bf16.msra.mxu0 %v352
    %779 = vmatmul.bf16.gmra.mxu0 %v756
    %v780 = vpop.f32.mrf.mxu0
    %v781 = vadd.f32 %v754, %v780
    %v782 = vpop.f32.mrf.mxu0
    %783 = vdwg.mxu0
    %v784 = vxor.u32 %v768, 2147483648
    %v785 = vxor.u32 %v781, 2147483648
    %v786 = vmul.f32 %v784, 1.442695
    %v787 = vpow.pop %v786
    %v788 = vmul.f32 %v785, 1.442695
    %v789 = vpow.pop %v788
    %v790 = vadd.f32 %v787, 1.0
    %v791 = vadd.f32 %v789, 1.0
    %v792 = vrcp.pop %v790
    %v793 = vmul.f32 %v790, %v792
    %v794 = vsub.f32 1.0, %v793
    %v795 = vmul.f32 %v792, %v794
    %v796 = vadd.f32 %v792, %v795
    %vm797 = vweird.f32 %v790
    %vm798 = vweird.f32 %v792
    %vm799 = vmor %vm797, %vm798
    %v800 = vsel %vm799, %v792, %v796
    %v801 = vand.u32 2147483647, %v790
    %vm802 = vcmp.eq.f32.partialorder %v801, 8.507059e+37
    %v803 = vand.u32 %v790, 2147483648
    %v804 = vor.u32 1.1754944e-38, %v803
    %v805 = vsel %vm802, %v804, %v800
    %v806 = vmul.f32 1.0, %v805
    %v807 = vrcp.pop %v791
    %v808 = vmul.f32 %v791, %v807
    %v809 = vsub.f32 1.0, %v808
    %v810 = vmul.f32 %v807, %v809
    %v811 = vadd.f32 %v807, %v810
    %vm812 = vweird.f32 %v791
    %vm813 = vweird.f32 %v807
    %vm814 = vmor %vm812, %vm813
    %v815 = vsel %vm814, %v807, %v811
    %v816 = vand.u32 2147483647, %v791
    %vm817 = vcmp.eq.f32.partialorder %v816, 8.507059e+37
    %v818 = vand.u32 %v791, 2147483648
    %v819 = vor.u32 1.1754944e-38, %v818
    %v820 = vsel %vm817, %v819, %v815
    %v821 = vmul.f32 1.0, %v820
    %v822 = vtanh.pop %v781
    %824 = vrot.lane.b32.xlu0 %v751, 64
    %v825 = vpop.permute.xlu0 %824
    %v827 = vmul.f32 %v806, %v825
    %829 = vrot.lane.b32.xlu0 %v822, 64
    %v830 = vpop.permute.xlu0 %829
    %v832 = vmul.f32 %v806, %v830
    %834 = vrot.lane.b32.xlu0 %v832, 64
    %v835 = vpop.permute.xlu0 %834
    %v837 = vadd.f32 %v827, %v835
    %v838 = vtanh.pop %v837
    %840 = vrot.lane.b32.xlu0 %v838, 64
    %v841 = vpop.permute.xlu0 %840
    %v843 = vmul.f32 %v821, %v841
    %v844 = vsel %vm141, %v843, %v746
    %846 = vrot.lane.b32.xlu0 %v837, 64
    %v847 = vpop.permute.xlu0 %846
    %v849 = vsel %vm141, %v847, %v751
    %v850 = vpack.c.bf16 %v844, %v844
    %v851 = vld [vmem:[#allocation2 + $0x50] sm:$0xff]
    %v852 = vld [vmem:[#allocation2 + $0x58] sm:$0xff]
    %v854 = vsel %vm230, %v850, 0
    %856 = vmatpush.bf16.msra.mxu0 0
    %857 = vmatpush.bf16.msra.mxu0 0
    %858 = vmatpush.bf16.msra.mxu0 0
    %859 = vmatpush.bf16.msra.mxu0 0
    %860 = vmatpush.bf16.msra.mxu0 %v357
    %861 = vmatpush.bf16.msra.mxu0 %v355
    %862 = vmatpush.bf16.msra.mxu0 %v353
    %863 = vmatpush.bf16.msra.mxu0 %v351
    %864 = vmatmul.bf16.gmra.mxu0 %v854
    %v865 = vpop.f32.mrf.mxu0
    %v866 = vadd.f32 %v851, %v865
    %v867 = vpop.f32.mrf.mxu0
    %868 = vdwg.mxu0
    %869 = vmatpush.bf16.msra.mxu0 0
    %870 = vmatpush.bf16.msra.mxu0 0
    %871 = vmatpush.bf16.msra.mxu0 0
    %872 = vmatpush.bf16.msra.mxu0 0
    %873 = vmatpush.bf16.msra.mxu0 %v358
    %874 = vmatpush.bf16.msra.mxu0 %v356
    %875 = vmatpush.bf16.msra.mxu0 %v354
    %876 = vmatpush.bf16.msra.mxu0 %v352
    %877 = vmatmul.bf16.gmra.mxu0 %v854
    %v878 = vpop.f32.mrf.mxu0
    %v879 = vadd.f32 %v852, %v878
    %v880 = vpop.f32.mrf.mxu0
    %881 = vdwg.mxu0
    %v882 = vxor.u32 %v866, 2147483648
    %v883 = vxor.u32 %v879, 2147483648
    %v884 = vmul.f32 %v882, 1.442695
    %v885 = vpow.pop %v884
    %v886 = vmul.f32 %v883, 1.442695
    %v887 = vpow.pop %v886
    %v888 = vadd.f32 %v885, 1.0
    %v889 = vadd.f32 %v887, 1.0
    %v890 = vrcp.pop %v888
    %v891 = vmul.f32 %v888, %v890
    %v892 = vsub.f32 1.0, %v891
    %v893 = vmul.f32 %v890, %v892
    %v894 = vadd.f32 %v890, %v893
    %vm895 = vweird.f32 %v888
    %vm896 = vweird.f32 %v890
    %vm897 = vmor %vm895, %vm896
    %v898 = vsel %vm897, %v890, %v894
    %v899 = vand.u32 2147483647, %v888
    %vm900 = vcmp.eq.f32.partialorder %v899, 8.507059e+37
    %v901 = vand.u32 %v888, 2147483648
    %v902 = vor.u32 1.1754944e-38, %v901
    %v903 = vsel %vm900, %v902, %v898
    %v904 = vmul.f32 1.0, %v903
    %v905 = vrcp.pop %v889
    %v906 = vmul.f32 %v889, %v905
    %v907 = vsub.f32 1.0, %v906
    %v908 = vmul.f32 %v905, %v907
    %v909 = vadd.f32 %v905, %v908
    %vm910 = vweird.f32 %v889
    %vm911 = vweird.f32 %v905
    %vm912 = vmor %vm910, %vm911
    %v913 = vsel %vm912, %v905, %v909
    %v914 = vand.u32 2147483647, %v889
    %vm915 = vcmp.eq.f32.partialorder %v914, 8.507059e+37
    %v916 = vand.u32 %v889, 2147483648
    %v917 = vor.u32 1.1754944e-38, %v916
    %v918 = vsel %vm915, %v917, %v913
    %v919 = vmul.f32 1.0, %v918
    %v920 = vtanh.pop %v879
    %922 = vrot.lane.b32.xlu0 %v849, 64
    %v923 = vpop.permute.xlu0 %922
    %v925 = vmul.f32 %v904, %v923
    %927 = vrot.lane.b32.xlu0 %v920, 64
    %v928 = vpop.permute.xlu0 %927
    %v930 = vmul.f32 %v904, %v928
    %932 = vrot.lane.b32.xlu0 %v930, 64
    %v933 = vpop.permute.xlu0 %932
    %v935 = vadd.f32 %v925, %v933
    %v936 = vtanh.pop %v935
    %938 = vrot.lane.b32.xlu0 %v936, 64
    %v939 = vpop.permute.xlu0 %938
    %v941 = vmul.f32 %v919, %v939
    %v942 = vsel %vm143, %v941, %v844
    %944 = vrot.lane.b32.xlu0 %v935, 64
    %v945 = vpop.permute.xlu0 %944
    %v947 = vsel %vm143, %v945, %v849
    %v948 = vpack.c.bf16 %v942, %v942
    %v949 = vld [vmem:[#allocation2 + $0x60] sm:$0xff]
    %v950 = vld [vmem:[#allocation2 + $0x68] sm:$0xff]
    %v952 = vsel %vm230, %v948, 0
    %954 = vmatpush.bf16.msra.mxu0 0
    %955 = vmatpush.bf16.msra.mxu0 0
    %956 = vmatpush.bf16.msra.mxu0 0
    %957 = vmatpush.bf16.msra.mxu0 0
    %958 = vmatpush.bf16.msra.mxu0 %v357
    %959 = vmatpush.bf16.msra.mxu0 %v355
    %960 = vmatpush.bf16.msra.mxu0 %v353
    %961 = vmatpush.bf16.msra.mxu0 %v351
    %962 = vmatmul.bf16.gmra.mxu0 %v952
    %v963 = vpop.f32.mrf.mxu0
    %v964 = vadd.f32 %v949, %v963
    %v965 = vpop.f32.mrf.mxu0
    %966 = vdwg.mxu0
    %967 = vmatpush.bf16.msra.mxu0 0
    %968 = vmatpush.bf16.msra.mxu0 0
    %969 = vmatpush.bf16.msra.mxu0 0
    %970 = vmatpush.bf16.msra.mxu0 0
    %971 = vmatpush.bf16.msra.mxu0 %v358
    %972 = vmatpush.bf16.msra.mxu0 %v356
    %973 = vmatpush.bf16.msra.mxu0 %v354
    %974 = vmatpush.bf16.msra.mxu0 %v352
    %975 = vmatmul.bf16.gmra.mxu0 %v952
    %v976 = vpop.f32.mrf.mxu0
    %v977 = vadd.f32 %v950, %v976
    %v978 = vpop.f32.mrf.mxu0
    %979 = vdwg.mxu0
    %v980 = vxor.u32 %v964, 2147483648
    %v981 = vxor.u32 %v977, 2147483648
    %v982 = vmul.f32 %v980, 1.442695
    %v983 = vpow.pop %v982
    %v984 = vmul.f32 %v981, 1.442695
    %v985 = vpow.pop %v984
    %v986 = vadd.f32 %v983, 1.0
    %v987 = vadd.f32 %v985, 1.0
    %v988 = vrcp.pop %v986
    %v989 = vmul.f32 %v986, %v988
    %v990 = vsub.f32 1.0, %v989
    %v991 = vmul.f32 %v988, %v990
    %v992 = vadd.f32 %v988, %v991
    %vm993 = vweird.f32 %v986
    %vm994 = vweird.f32 %v988
    %vm995 = vmor %vm993, %vm994
    %v996 = vsel %vm995, %v988, %v992
    %v997 = vand.u32 2147483647, %v986
    %vm998 = vcmp.eq.f32.partialorder %v997, 8.507059e+37
    %v999 = vand.u32 %v986, 2147483648
    %v1000 = vor.u32 1.1754944e-38, %v999
    %v1001 = vsel %vm998, %v1000, %v996
    %v1002 = vmul.f32 1.0, %v1001
    %v1003 = vrcp.pop %v987
    %v1004 = vmul.f32 %v987, %v1003
    %v1005 = vsub.f32 1.0, %v1004
    %v1006 = vmul.f32 %v1003, %v1005
    %v1007 = vadd.f32 %v1003, %v1006
    %vm1008 = vweird.f32 %v987
    %vm1009 = vweird.f32 %v1003
    %vm1010 = vmor %vm1008, %vm1009
    %v1011 = vsel %vm1010, %v1003, %v1007
    %v1012 = vand.u32 2147483647, %v987
    %vm1013 = vcmp.eq.f32.partialorder %v1012, 8.507059e+37
    %v1014 = vand.u32 %v987, 2147483648
    %v1015 = vor.u32 1.1754944e-38, %v1014
    %v1016 = vsel %vm1013, %v1015, %v1011
    %v1017 = vmul.f32 1.0, %v1016
    %v1018 = vtanh.pop %v977
    %1020 = vrot.lane.b32.xlu0 %v947, 64
    %v1021 = vpop.permute.xlu0 %1020
    %v1023 = vmul.f32 %v1002, %v1021
    %1025 = vrot.lane.b32.xlu0 %v1018, 64
    %v1026 = vpop.permute.xlu0 %1025
    %v1028 = vmul.f32 %v1002, %v1026
    %1030 = vrot.lane.b32.xlu0 %v1028, 64
    %v1031 = vpop.permute.xlu0 %1030
    %v1033 = vadd.f32 %v1023, %v1031
    %v1034 = vtanh.pop %v1033
    %1036 = vrot.lane.b32.xlu0 %v1034, 64
    %v1037 = vpop.permute.xlu0 %1036
    %v1039 = vmul.f32 %v1017, %v1037
    %v1040 = vsel %vm145, %v1039, %v942
    %1042 = vrot.lane.b32.xlu0 %v1033, 64
    %v1043 = vpop.permute.xlu0 %1042
    %v1045 = vsel %vm145, %v1043, %v947
    %v1046 = vpack.c.bf16 %v1040, %v1040
    %v1047 = vld [vmem:[#allocation2 + $0x70] sm:$0xff]
    %v1048 = vld [vmem:[#allocation2 + $0x78] sm:$0xff]
    %v1050 = vsel %vm230, %v1046, 0
    %1052 = vmatpush.bf16.msra.mxu0 0
    %1053 = vmatpush.bf16.msra.mxu0 0
    %1054 = vmatpush.bf16.msra.mxu0 0
    %1055 = vmatpush.bf16.msra.mxu0 0
    %1056 = vmatpush.bf16.msra.mxu0 %v357
    %1057 = vmatpush.bf16.msra.mxu0 %v355
    %1058 = vmatpush.bf16.msra.mxu0 %v353
    %1059 = vmatpush.bf16.msra.mxu0 %v351
    %1060 = vmatmul.bf16.gmra.mxu0 %v1050
    %v1061 = vpop.f32.mrf.mxu0
    %v1062 = vadd.f32 %v1047, %v1061
    %v1063 = vpop.f32.mrf.mxu0
    %1064 = vdwg.mxu0
    %1065 = vmatpush.bf16.msra.mxu0 0
    %1066 = vmatpush.bf16.msra.mxu0 0
    %1067 = vmatpush.bf16.msra.mxu0 0
    %1068 = vmatpush.bf16.msra.mxu0 0
    %1069 = vmatpush.bf16.msra.mxu0 %v358
    %1070 = vmatpush.bf16.msra.mxu0 %v356
    %1071 = vmatpush.bf16.msra.mxu0 %v354
    %1072 = vmatpush.bf16.msra.mxu0 %v352
    %1073 = vmatmul.bf16.gmra.mxu0 %v1050
    %v1074 = vpop.f32.mrf.mxu0
    %v1075 = vadd.f32 %v1048, %v1074
    %v1076 = vpop.f32.mrf.mxu0
    %1077 = vdwg.mxu0
    %v1078 = vxor.u32 %v1062, 2147483648
    %v1079 = vxor.u32 %v1075, 2147483648
    %v1080 = vmul.f32 %v1078, 1.442695
    %v1081 = vpow.pop %v1080
    %v1082 = vmul.f32 %v1079, 1.442695
    %v1083 = vpow.pop %v1082
    %v1084 = vadd.f32 %v1081, 1.0
    %v1085 = vadd.f32 %v1083, 1.0
    %v1086 = vrcp.pop %v1084
    %v1087 = vmul.f32 %v1084, %v1086
    %v1088 = vsub.f32 1.0, %v1087
    %v1089 = vmul.f32 %v1086, %v1088
    %v1090 = vadd.f32 %v1086, %v1089
    %vm1091 = vweird.f32 %v1084
    %vm1092 = vweird.f32 %v1086
    %vm1093 = vmor %vm1091, %vm1092
    %v1094 = vsel %vm1093, %v1086, %v1090
    %v1095 = vand.u32 2147483647, %v1084
    %vm1096 = vcmp.eq.f32.partialorder %v1095, 8.507059e+37
    %v1097 = vand.u32 %v1084, 2147483648
    %v1098 = vor.u32 1.1754944e-38, %v1097
    %v1099 = vsel %vm1096, %v1098, %v1094
    %v1100 = vmul.f32 1.0, %v1099
    %v1101 = vrcp.pop %v1085
    %v1102 = vmul.f32 %v1085, %v1101
    %v1103 = vsub.f32 1.0, %v1102
    %v1104 = vmul.f32 %v1101, %v1103
    %v1105 = vadd.f32 %v1101, %v1104
    %vm1106 = vweird.f32 %v1085
    %vm1107 = vweird.f32 %v1101
    %vm1108 = vmor %vm1106, %vm1107
    %v1109 = vsel %vm1108, %v1101, %v1105
    %v1110 = vand.u32 2147483647, %v1085
    %vm1111 = vcmp.eq.f32.partialorder %v1110, 8.507059e+37
    %v1112 = vand.u32 %v1085, 2147483648
    %v1113 = vor.u32 1.1754944e-38, %v1112
    %v1114 = vsel %vm1111, %v1113, %v1109
    %v1115 = vmul.f32 1.0, %v1114
    %v1116 = vtanh.pop %v1075
    %1118 = vrot.lane.b32.xlu0 %v1045, 64
    %v1119 = vpop.permute.xlu0 %1118
    %v1121 = vmul.f32 %v1100, %v1119
    %1123 = vrot.lane.b32.xlu0 %v1116, 64
    %v1124 = vpop.permute.xlu0 %1123
    %v1126 = vmul.f32 %v1100, %v1124
    %1128 = vrot.lane.b32.xlu0 %v1126, 64
    %v1129 = vpop.permute.xlu0 %1128
    %v1131 = vadd.f32 %v1121, %v1129
    %v1132 = vtanh.pop %v1131
    %1134 = vrot.lane.b32.xlu0 %v1132, 64
    %v1135 = vpop.permute.xlu0 %1134
    %v1137 = vmul.f32 %v1115, %v1135
    %v1138 = vsel %vm147, %v1137, %v1040
    %1140 = vrot.lane.b32.xlu0 %v1138, 64
    %v1141 = vpop.permute.xlu0 %1140
    %v1143 = vsel %vm230, %v452, %v1141
    %1145 = vrot.lane.b32.xlu0 %v1040, 64
    %v1146 = vpop.permute.xlu0 %1145
    %v1148 = vsel %vm230, %v550, %v1146
    %1150 = vrot.lane.b32.xlu0 %v942, 64
    %v1151 = vpop.permute.xlu0 %1150
    %v1153 = vsel %vm230, %v648, %v1151
    %1155 = vrot.lane.b32.xlu0 %v844, 64
    %v1156 = vpop.permute.xlu0 %1155
    %v1158 = vsel %vm230, %v746, %v1156
    %1160 = vrot.lane.b32.xlu0 %v746, 64
    %v1161 = vpop.permute.xlu0 %1160
    %v1163 = vsel %vm230, %v844, %v1161
    %1165 = vrot.lane.b32.xlu0 %v648, 64
    %v1166 = vpop.permute.xlu0 %1165
    %v1168 = vsel %vm230, %v942, %v1166
    %1170 = vrot.lane.b32.xlu0 %v550, 64
    %v1171 = vpop.permute.xlu0 %1170
    %v1173 = vsel %vm230, %v1040, %v1171
    %1175 = vrot.lane.b32.xlu0 %v452, 64
    %v1176 = vpop.permute.xlu0 %1175
    %v1178 = vsel %vm230, %v1138, %v1176
    %v1179 = vpack.c.bf16 %v1148, %v1143
    %v1180 = vpack.c.bf16 %v1158, %v1153
    %v1181 = vpack.c.bf16 %v1168, %v1163
    %v1182 = vpack.c.bf16 %v1178, %v1173
    %v1183 = vld [vmem:[#allocation11] sm:$0xff]
    %v1184 = vld [vmem:[#allocation11 + $0x8] sm:$0xff]
    %v1185 = vld [vmem:[#allocation11 + $0x10] sm:$0xff]
    %v1186 = vld [vmem:[#allocation11 + $0x18] sm:$0xff]
    %v1187 = vld [vmem:[#allocation11 + $0x20] sm:$0xff]
    %v1188 = vld [vmem:[#allocation11 + $0x28] sm:$0xff]
    %v1189 = vld [vmem:[#allocation11 + $0x30] sm:$0xff]
    %v1190 = vld [vmem:[#allocation11 + $0x38] sm:$0xff]
    %v1191 = vld [vmem:[#allocation11 + $0x40] sm:$0xff]
    %v1192 = vld [vmem:[#allocation11 + $0x48] sm:$0xff]
    %v1193 = vld [vmem:[#allocation11 + $0x50] sm:$0xff]
    %v1194 = vld [vmem:[#allocation11 + $0x58] sm:$0xff]
    %v1195 = vld [vmem:[#allocation11 + $0x60] sm:$0xff]
    %v1196 = vld [vmem:[#allocation11 + $0x68] sm:$0xff]
    %v1197 = vld [vmem:[#allocation11 + $0x70] sm:$0xff]
    %v1198 = vld [vmem:[#allocation11 + $0x78] sm:$0xff]
    %v1199 = vld [vmem:[%s7] sm:$0x3]
    %v1201 = vperm.slane %v1199, 0
    %v1202 = vperm.slane %v1199, 1
    %v1221 = vunpack.c.l.b16 %v1183
    %v1222 = vunpack.c.h.b16 %v1183
    %v1223 = vunpack.c.l.b16 %v1184
    %v1224 = vunpack.c.h.b16 %v1184
    %v1225 = vunpack.c.l.b16 %v1185
    %v1226 = vunpack.c.h.b16 %v1185
    %v1227 = vunpack.c.l.b16 %v1186
    %v1228 = vunpack.c.h.b16 %v1186
    %v1229 = vunpack.c.l.b16 %v1187
    %v1230 = vunpack.c.h.b16 %v1187
    %v1231 = vunpack.c.l.b16 %v1188
    %v1232 = vunpack.c.h.b16 %v1188
    %v1233 = vunpack.c.l.b16 %v1189
    %v1234 = vunpack.c.h.b16 %v1189
    %v1235 = vunpack.c.l.b16 %v1190
    %v1236 = vunpack.c.h.b16 %v1190
    %v1237 = vunpack.c.l.b16 %v1191
    %v1238 = vunpack.c.h.b16 %v1191
    %v1239 = vunpack.c.l.b16 %v1192
    %v1240 = vunpack.c.h.b16 %v1192
    %v1241 = vunpack.c.l.b16 %v1193
    %v1242 = vunpack.c.h.b16 %v1193
    %v1243 = vunpack.c.l.b16 %v1194
    %v1244 = vunpack.c.h.b16 %v1194
    %v1245 = vunpack.c.l.b16 %v1195
    %v1246 = vunpack.c.h.b16 %v1195
    %v1247 = vunpack.c.l.b16 %v1196
    %v1248 = vunpack.c.h.b16 %v1196
    %v1249 = vunpack.c.l.b16 %v1197
    %v1250 = vunpack.c.h.b16 %v1197
    %v1251 = vunpack.c.l.b16 %v1198
    %v1252 = vunpack.c.h.b16 %v1198
    %v1253 = vpack.c.b16 %v1223, %v1221
    %v1254 = vpack.c.b16 %v1224, %v1222
    %v1255 = vpack.c.b16 %v1227, %v1225
    %v1256 = vpack.c.b16 %v1228, %v1226
    %v1257 = vpack.c.b16 %v1231, %v1229
    %v1258 = vpack.c.b16 %v1232, %v1230
    %v1259 = vpack.c.b16 %v1235, %v1233
    %v1260 = vpack.c.b16 %v1236, %v1234
    %v1261 = vpack.c.b16 %v1239, %v1237
    %v1262 = vpack.c.b16 %v1240, %v1238
    %v1263 = vpack.c.b16 %v1243, %v1241
    %v1264 = vpack.c.b16 %v1244, %v1242
    %v1265 = vpack.c.b16 %v1247, %v1245
    %v1266 = vpack.c.b16 %v1248, %v1246
    %v1267 = vpack.c.b16 %v1251, %v1249
    %v1268 = vpack.c.b16 %v1252, %v1250
    %1285 = vmatpush.bf16.msra.mxu0 %v1267
    %1286 = vmatpush.bf16.msra.mxu0 %v1265
    %1287 = vmatpush.bf16.msra.mxu0 %v1263
    %1288 = vmatpush.bf16.msra.mxu0 %v1261
    %1289 = vmatpush.bf16.msra.mxu0 %v1259
    %1290 = vmatpush.bf16.msra.mxu0 %v1257
    %1291 = vmatpush.bf16.msra.mxu0 %v1255
    %1292 = vmatpush.bf16.msra.mxu0 %v1253
    %1293 = vmatmul.bf16.gmra.mxu0 %v1179
    %v1294 = vpop.f32.mrf.mxu0
    %v1295 = vadd.f32 %v1201, %v1294
    %v1296 = vpop.f32.mrf.mxu0
    %v1297 = vadd.f32 %v1201, %v1296
    %1298 = vmatmul.bf16.gmra.mxu0 %v1180
    %v1299 = vpop.f32.mrf.mxu0
    %v1300 = vadd.f32 %v1201, %v1299
    %v1301 = vpop.f32.mrf.mxu0
    %v1302 = vadd.f32 %v1201, %v1301
    %1303 = vmatmul.bf16.gmra.mxu0 %v1181
    %v1304 = vpop.f32.mrf.mxu0
    %v1305 = vadd.f32 %v1201, %v1304
    %v1306 = vpop.f32.mrf.mxu0
    %v1307 = vadd.f32 %v1201, %v1306
    %1308 = vmatmul.bf16.gmra.mxu0 %v1182
    %v1309 = vpop.f32.mrf.mxu0
    %v1310 = vadd.f32 %v1201, %v1309
    %v1311 = vpop.f32.mrf.mxu0
    %v1312 = vadd.f32 %v1201, %v1311
    %1313 = vdwg.mxu0
    %1314 = vmatpush.bf16.msra.mxu0 %v1268
    %1315 = vmatpush.bf16.msra.mxu0 %v1266
    %1316 = vmatpush.bf16.msra.mxu0 %v1264
    %1317 = vmatpush.bf16.msra.mxu0 %v1262
    %1318 = vmatpush.bf16.msra.mxu0 %v1260
    %1319 = vmatpush.bf16.msra.mxu0 %v1258
    %1320 = vmatpush.bf16.msra.mxu0 %v1256
    %1321 = vmatpush.bf16.msra.mxu0 %v1254
    %1322 = vmatmul.bf16.gmra.mxu0 %v1179
    %v1323 = vpop.f32.mrf.mxu0
    %v1324 = vadd.f32 %v1202, %v1323
    %v1325 = vpop.f32.mrf.mxu0
    %v1326 = vadd.f32 %v1202, %v1325
    %1327 = vmatmul.bf16.gmra.mxu0 %v1180
    %v1328 = vpop.f32.mrf.mxu0
    %v1329 = vadd.f32 %v1202, %v1328
    %v1330 = vpop.f32.mrf.mxu0
    %v1331 = vadd.f32 %v1202, %v1330
    %1332 = vmatmul.bf16.gmra.mxu0 %v1181
    %v1333 = vpop.f32.mrf.mxu0
    %v1334 = vadd.f32 %v1202, %v1333
    %v1335 = vpop.f32.mrf.mxu0
    %v1336 = vadd.f32 %v1202, %v1335
    %1337 = vmatmul.bf16.gmra.mxu0 %v1182
    %v1338 = vpop.f32.mrf.mxu0
    %v1339 = vadd.f32 %v1202, %v1338
    %v1340 = vpop.f32.mrf.mxu0
    %v1341 = vadd.f32 %v1202, %v1340
    %1342 = vdwg.mxu0
    %1343 = vst [vmem:[#allocation2] sm:$0xff] %v1295
    %1344 = vst [vmem:[#allocation2 + $0x8] sm:$0xff] %v1324
    %1345 = vst [vmem:[#allocation2 + $0x10] sm:$0xff] %v1297
    %1346 = vst [vmem:[#allocation2 + $0x18] sm:$0xff] %v1326
    %1347 = vst [vmem:[#allocation2 + $0x20] sm:$0xff] %v1300
    %1348 = vst [vmem:[#allocation2 + $0x28] sm:$0xff] %v1329
    %1349 = vst [vmem:[#allocation2 + $0x30] sm:$0xff] %v1302
    %1350 = vst [vmem:[#allocation2 + $0x38] sm:$0xff] %v1331
    %1351 = vst [vmem:[#allocation2 + $0x40] sm:$0xff] %v1305
    %1352 = vst [vmem:[#allocation2 + $0x48] sm:$0xff] %v1334
    %1353 = vst [vmem:[#allocation2 + $0x50] sm:$0xff] %v1307
    %1354 = vst [vmem:[#allocation2 + $0x58] sm:$0xff] %v1336
    %1355 = vst [vmem:[#allocation2 + $0x60] sm:$0xff] %v1310
    %1356 = vst [vmem:[#allocation2 + $0x68] sm:$0xff] %v1339
    %1357 = vst [vmem:[#allocation2 + $0x70] sm:$0xff] %v1312
    %1358 = vst [vmem:[#allocation2 + $0x78] sm:$0xff] %v1341
    %v1359 = vld [vmem:[#allocation12] sm:$0xff]
    %v1360 = vld [vmem:[#allocation12 + $0x8] sm:$0xff]
    %v1361 = vld [vmem:[#allocation12 + $0x10] sm:$0xff]
    %v1362 = vld [vmem:[#allocation12 + $0x18] sm:$0xff]
    %v1363 = vld [vmem:[#allocation12 + $0x20] sm:$0xff]
    %v1364 = vld [vmem:[#allocation12 + $0x28] sm:$0xff]
    %v1365 = vld [vmem:[#allocation12 + $0x30] sm:$0xff]
    %v1366 = vld [vmem:[#allocation12 + $0x38] sm:$0xff]
    %v1367 = vld [vmem:[#allocation2] sm:$0xff]
    %v1368 = vld [vmem:[#allocation2 + $0x8] sm:$0xff]
    %v1377 = vunpack.c.l.b16 %v1359
    %v1378 = vunpack.c.h.b16 %v1359
    %v1379 = vunpack.c.l.b16 %v1360
    %v1380 = vunpack.c.h.b16 %v1360
    %v1381 = vunpack.c.l.b16 %v1361
    %v1382 = vunpack.c.h.b16 %v1361
    %v1383 = vunpack.c.l.b16 %v1362
    %v1384 = vunpack.c.h.b16 %v1362
    %v1385 = vunpack.c.l.b16 %v1363
    %v1386 = vunpack.c.h.b16 %v1363
    %v1387 = vunpack.c.l.b16 %v1364
    %v1388 = vunpack.c.h.b16 %v1364
    %v1389 = vunpack.c.l.b16 %v1365
    %v1390 = vunpack.c.h.b16 %v1365
    %v1391 = vunpack.c.l.b16 %v1366
    %v1392 = vunpack.c.h.b16 %v1366
    %v1393 = vpack.c.b16 %v1379, %v1377
    %v1394 = vpack.c.b16 %v1380, %v1378
    %v1395 = vpack.c.b16 %v1383, %v1381
    %v1396 = vpack.c.b16 %v1384, %v1382
    %v1397 = vpack.c.b16 %v1387, %v1385
    %v1398 = vpack.c.b16 %v1388, %v1386
    %v1399 = vpack.c.b16 %v1391, %v1389
    %v1400 = vpack.c.b16 %v1392, %v1390
    %1409 = vmatpush.bf16.msra.mxu0 0
    %1410 = vmatpush.bf16.msra.mxu0 0
    %1411 = vmatpush.bf16.msra.mxu0 0
    %1412 = vmatpush.bf16.msra.mxu0 0
    %1413 = vmatpush.bf16.msra.mxu0 %v1399
    %1414 = vmatpush.bf16.msra.mxu0 %v1397
    %1415 = vmatpush.bf16.msra.mxu0 %v1395
    %1416 = vmatpush.bf16.msra.mxu0 %v1393
    %1417 = vmatmul.bf16.gmra.mxu0 %v368
    %v1418 = vpop.f32.mrf.mxu0
    %v1419 = vadd.f32 %v1367, %v1418
    %v1420 = vpop.f32.mrf.mxu0
    %1421 = vdwg.mxu0
    %1422 = vmatpush.bf16.msra.mxu0 0
    %1423 = vmatpush.bf16.msra.mxu0 0
    %1424 = vmatpush.bf16.msra.mxu0 0
    %1425 = vmatpush.bf16.msra.mxu0 0
    %1426 = vmatpush.bf16.msra.mxu0 %v1400
    %1427 = vmatpush.bf16.msra.mxu0 %v1398
    %1428 = vmatpush.bf16.msra.mxu0 %v1396
    %1429 = vmatpush.bf16.msra.mxu0 %v1394
    %1430 = vmatmul.bf16.gmra.mxu0 %v368
    %v1431 = vpop.f32.mrf.mxu0
    %v1432 = vadd.f32 %v1368, %v1431
    %v1433 = vpop.f32.mrf.mxu0
    %1434 = vdwg.mxu0
    %v1435 = vxor.u32 %v1419, 2147483648
    %v1436 = vxor.u32 %v1432, 2147483648
    %v1437 = vmul.f32 %v1435, 1.442695
    %v1438 = vpow.pop %v1437
    %v1439 = vmul.f32 %v1436, 1.442695
    %v1440 = vpow.pop %v1439
    %v1441 = vadd.f32 %v1438, 1.0
    %v1442 = vadd.f32 %v1440, 1.0
    %v1443 = vrcp.pop %v1441
    %v1444 = vmul.f32 %v1441, %v1443
    %v1445 = vsub.f32 1.0, %v1444
    %v1446 = vmul.f32 %v1443, %v1445
    %v1447 = vadd.f32 %v1443, %v1446
    %vm1448 = vweird.f32 %v1441
    %vm1449 = vweird.f32 %v1443
    %vm1450 = vmor %vm1448, %vm1449
    %v1451 = vsel %vm1450, %v1443, %v1447
    %v1452 = vand.u32 2147483647, %v1441
    %vm1453 = vcmp.eq.f32.partialorder %v1452, 8.507059e+37
    %v1454 = vand.u32 %v1441, 2147483648
    %v1455 = vor.u32 1.1754944e-38, %v1454
    %v1456 = vsel %vm1453, %v1455, %v1451
    %v1457 = vmul.f32 1.0, %v1456
    %v1458 = vrcp.pop %v1442
    %v1459 = vmul.f32 %v1442, %v1458
    %v1460 = vsub.f32 1.0, %v1459
    %v1461 = vmul.f32 %v1458, %v1460
    %v1462 = vadd.f32 %v1458, %v1461
    %vm1463 = vweird.f32 %v1442
    %vm1464 = vweird.f32 %v1458
    %vm1465 = vmor %vm1463, %vm1464
    %v1466 = vsel %vm1465, %v1458, %v1462
    %v1467 = vand.u32 2147483647, %v1442
    %vm1468 = vcmp.eq.f32.partialorder %v1467, 8.507059e+37
    %v1469 = vand.u32 %v1442, 2147483648
    %v1470 = vor.u32 1.1754944e-38, %v1469
    %v1471 = vsel %vm1468, %v1470, %v1466
    %v1472 = vmul.f32 1.0, %v1471
    %v1473 = vtanh.pop %v1432
    %v1474 = vmul.f32 %v1457, 0.0
    %1476 = vrot.lane.b32.xlu0 %v1473, 64
    %v1477 = vpop.permute.xlu0 %1476
    %v1479 = vmul.f32 %v1457, %v1477
    %1481 = vrot.lane.b32.xlu0 %v1479, 64
    %v1482 = vpop.permute.xlu0 %1481
    %v1484 = vadd.f32 %v1474, %v1482
    %v1485 = vtanh.pop %v1484
    %1487 = vrot.lane.b32.xlu0 %v1485, 64
    %v1488 = vpop.permute.xlu0 %1487
    %v1490 = vmul.f32 %v1472, %v1488
    %v1491 = vsel %vm133, %v1490, 0.0
    %1493 = vrot.lane.b32.xlu0 %v1484, 64
    %v1494 = vpop.permute.xlu0 %1493
    %v1496 = vsel %vm133, %v1494, 0.0
    %v1497 = vpack.c.bf16 %v1491, %v1491
    %v1498 = vld [vmem:[#allocation2 + $0x10] sm:$0xff]
    %v1499 = vld [vmem:[#allocation2 + $0x18] sm:$0xff]
    %v1501 = vsel %vm230, %v1497, 0
    %1503 = vmatpush.bf16.msra.mxu0 0
    %1504 = vmatpush.bf16.msra.mxu0 0
    %1505 = vmatpush.bf16.msra.mxu0 0
    %1506 = vmatpush.bf16.msra.mxu0 0
    %1507 = vmatpush.bf16.msra.mxu0 %v1399
    %1508 = vmatpush.bf16.msra.mxu0 %v1397
    %1509 = vmatpush.bf16.msra.mxu0 %v1395
    %1510 = vmatpush.bf16.msra.mxu0 %v1393
    %1511 = vmatmul.bf16.gmra.mxu0 %v1501
    %v1512 = vpop.f32.mrf.mxu0
    %v1513 = vadd.f32 %v1498, %v1512
    %v1514 = vpop.f32.mrf.mxu0
    %1515 = vdwg.mxu0
    %1516 = vmatpush.bf16.msra.mxu0 0
    %1517 = vmatpush.bf16.msra.mxu0 0
    %1518 = vmatpush.bf16.msra.mxu0 0
    %1519 = vmatpush.bf16.msra.mxu0 0
    %1520 = vmatpush.bf16.msra.mxu0 %v1400
    %1521 = vmatpush.bf16.msra.mxu0 %v1398
    %1522 = vmatpush.bf16.msra.mxu0 %v1396
    %1523 = vmatpush.bf16.msra.mxu0 %v1394
    %1524 = vmatmul.bf16.gmra.mxu0 %v1501
    %v1525 = vpop.f32.mrf.mxu0
    %v1526 = vadd.f32 %v1499, %v1525
    %v1527 = vpop.f32.mrf.mxu0
    %1528 = vdwg.mxu0
    %v1529 = vxor.u32 %v1513, 2147483648
    %v1530 = vxor.u32 %v1526, 2147483648
    %v1531 = vmul.f32 %v1529, 1.442695
    %v1532 = vpow.pop %v1531
    %v1533 = vmul.f32 %v1530, 1.442695
    %v1534 = vpow.pop %v1533
    %v1535 = vadd.f32 %v1532, 1.0
    %v1536 = vadd.f32 %v1534, 1.0
    %v1537 = vrcp.pop %v1535
    %v1538 = vmul.f32 %v1535, %v1537
    %v1539 = vsub.f32 1.0, %v1538
    %v1540 = vmul.f32 %v1537, %v1539
    %v1541 = vadd.f32 %v1537, %v1540
    %vm1542 = vweird.f32 %v1535
    %vm1543 = vweird.f32 %v1537
    %vm1544 = vmor %vm1542, %vm1543
    %v1545 = vsel %vm1544, %v1537, %v1541
    %v1546 = vand.u32 2147483647, %v1535
    %vm1547 = vcmp.eq.f32.partialorder %v1546, 8.507059e+37
    %v1548 = vand.u32 %v1535, 2147483648
    %v1549 = vor.u32 1.1754944e-38, %v1548
    %v1550 = vsel %vm1547, %v1549, %v1545
    %v1551 = vmul.f32 1.0, %v1550
    %v1552 = vrcp.pop %v1536
    %v1553 = vmul.f32 %v1536, %v1552
    %v1554 = vsub.f32 1.0, %v1553
    %v1555 = vmul.f32 %v1552, %v1554
    %v1556 = vadd.f32 %v1552, %v1555
    %vm1557 = vweird.f32 %v1536
    %vm1558 = vweird.f32 %v1552
    %vm1559 = vmor %vm1557, %vm1558
    %v1560 = vsel %vm1559, %v1552, %v1556
    %v1561 = vand.u32 2147483647, %v1536
    %vm1562 = vcmp.eq.f32.partialorder %v1561, 8.507059e+37
    %v1563 = vand.u32 %v1536, 2147483648
    %v1564 = vor.u32 1.1754944e-38, %v1563
    %v1565 = vsel %vm1562, %v1564, %v1560
    %v1566 = vmul.f32 1.0, %v1565
    %v1567 = vtanh.pop %v1526
    %1569 = vrot.lane.b32.xlu0 %v1496, 64
    %v1570 = vpop.permute.xlu0 %1569
    %v1572 = vmul.f32 %v1551, %v1570
    %1574 = vrot.lane.b32.xlu0 %v1567, 64
    %v1575 = vpop.permute.xlu0 %1574
    %v1577 = vmul.f32 %v1551, %v1575
    %1579 = vrot.lane.b32.xlu0 %v1577, 64
    %v1580 = vpop.permute.xlu0 %1579
    %v1582 = vadd.f32 %v1572, %v1580
    %v1583 = vtanh.pop %v1582
    %1585 = vrot.lane.b32.xlu0 %v1583, 64
    %v1586 = vpop.permute.xlu0 %1585
    %v1588 = vmul.f32 %v1566, %v1586
    %v1589 = vsel %vm135, %v1588, %v1491
    %1591 = vrot.lane.b32.xlu0 %v1582, 64
    %v1592 = vpop.permute.xlu0 %1591
    %v1594 = vsel %vm135, %v1592, %v1496
    %v1595 = vpack.c.bf16 %v1589, %v1589
    %v1596 = vld [vmem:[#allocation2 + $0x20] sm:$0xff]
    %v1597 = vld [vmem:[#allocation2 + $0x28] sm:$0xff]
    %v1599 = vsel %vm230, %v1595, 0
    %1601 = vmatpush.bf16.msra.mxu0 0
    %1602 = vmatpush.bf16.msra.mxu0 0
    %1603 = vmatpush.bf16.msra.mxu0 0
    %1604 = vmatpush.bf16.msra.mxu0 0
    %1605 = vmatpush.bf16.msra.mxu0 %v1399
    %1606 = vmatpush.bf16.msra.mxu0 %v1397
    %1607 = vmatpush.bf16.msra.mxu0 %v1395
    %1608 = vmatpush.bf16.msra.mxu0 %v1393
    %1609 = vmatmul.bf16.gmra.mxu0 %v1599
    %v1610 = vpop.f32.mrf.mxu0
    %v1611 = vadd.f32 %v1596, %v1610
    %v1612 = vpop.f32.mrf.mxu0
    %1613 = vdwg.mxu0
    %1614 = vmatpush.bf16.msra.mxu0 0
    %1615 = vmatpush.bf16.msra.mxu0 0
    %1616 = vmatpush.bf16.msra.mxu0 0
    %1617 = vmatpush.bf16.msra.mxu0 0
    %1618 = vmatpush.bf16.msra.mxu0 %v1400
    %1619 = vmatpush.bf16.msra.mxu0 %v1398
    %1620 = vmatpush.bf16.msra.mxu0 %v1396
    %1621 = vmatpush.bf16.msra.mxu0 %v1394
    %1622 = vmatmul.bf16.gmra.mxu0 %v1599
    %v1623 = vpop.f32.mrf.mxu0
    %v1624 = vadd.f32 %v1597, %v1623
    %v1625 = vpop.f32.mrf.mxu0
    %1626 = vdwg.mxu0
    %v1627 = vxor.u32 %v1611, 2147483648
    %v1628 = vxor.u32 %v1624, 2147483648
    %v1629 = vmul.f32 %v1627, 1.442695
    %v1630 = vpow.pop %v1629
    %v1631 = vmul.f32 %v1628, 1.442695
    %v1632 = vpow.pop %v1631
    %v1633 = vadd.f32 %v1630, 1.0
    %v1634 = vadd.f32 %v1632, 1.0
    %v1635 = vrcp.pop %v1633
    %v1636 = vmul.f32 %v1633, %v1635
    %v1637 = vsub.f32 1.0, %v1636
    %v1638 = vmul.f32 %v1635, %v1637
    %v1639 = vadd.f32 %v1635, %v1638
    %vm1640 = vweird.f32 %v1633
    %vm1641 = vweird.f32 %v1635
    %vm1642 = vmor %vm1640, %vm1641
    %v1643 = vsel %vm1642, %v1635, %v1639
    %v1644 = vand.u32 2147483647, %v1633
    %vm1645 = vcmp.eq.f32.partialorder %v1644, 8.507059e+37
    %v1646 = vand.u32 %v1633, 2147483648
    %v1647 = vor.u32 1.1754944e-38, %v1646
    %v1648 = vsel %vm1645, %v1647, %v1643
    %v1649 = vmul.f32 1.0, %v1648
    %v1650 = vrcp.pop %v1634
    %v1651 = vmul.f32 %v1634, %v1650
    %v1652 = vsub.f32 1.0, %v1651
    %v1653 = vmul.f32 %v1650, %v1652
    %v1654 = vadd.f32 %v1650, %v1653
    %vm1655 = vweird.f32 %v1634
    %vm1656 = vweird.f32 %v1650
    %vm1657 = vmor %vm1655, %vm1656
    %v1658 = vsel %vm1657, %v1650, %v1654
    %v1659 = vand.u32 2147483647, %v1634
    %vm1660 = vcmp.eq.f32.partialorder %v1659, 8.507059e+37
    %v1661 = vand.u32 %v1634, 2147483648
    %v1662 = vor.u32 1.1754944e-38, %v1661
    %v1663 = vsel %vm1660, %v1662, %v1658
    %v1664 = vmul.f32 1.0, %v1663
    %v1665 = vtanh.pop %v1624
    %1667 = vrot.lane.b32.xlu0 %v1594, 64
    %v1668 = vpop.permute.xlu0 %1667
    %v1670 = vmul.f32 %v1649, %v1668
    %1672 = vrot.lane.b32.xlu0 %v1665, 64
    %v1673 = vpop.permute.xlu0 %1672
    %v1675 = vmul.f32 %v1649, %v1673
    %1677 = vrot.lane.b32.xlu0 %v1675, 64
    %v1678 = vpop.permute.xlu0 %1677
    %v1680 = vadd.f32 %v1670, %v1678
    %v1681 = vtanh.pop %v1680
    %1683 = vrot.lane.b32.xlu0 %v1681, 64
    %v1684 = vpop.permute.xlu0 %1683
    %v1686 = vmul.f32 %v1664, %v1684
    %v1687 = vsel %vm137, %v1686, %v1589
    %1689 = vrot.lane.b32.xlu0 %v1680, 64
    %v1690 = vpop.permute.xlu0 %1689
    %v1692 = vsel %vm137, %v1690, %v1594
    %v1693 = vpack.c.bf16 %v1687, %v1687
    %v1694 = vld [vmem:[#allocation2 + $0x30] sm:$0xff]
    %v1695 = vld [vmem:[#allocation2 + $0x38] sm:$0xff]
    %v1697 = vsel %vm230, %v1693, 0
    %1699 = vmatpush.bf16.msra.mxu0 0
    %1700 = vmatpush.bf16.msra.mxu0 0
    %1701 = vmatpush.bf16.msra.mxu0 0
    %1702 = vmatpush.bf16.msra.mxu0 0
    %1703 = vmatpush.bf16.msra.mxu0 %v1399
    %1704 = vmatpush.bf16.msra.mxu0 %v1397
    %1705 = vmatpush.bf16.msra.mxu0 %v1395
    %1706 = vmatpush.bf16.msra.mxu0 %v1393
    %1707 = vmatmul.bf16.gmra.mxu0 %v1697
    %v1708 = vpop.f32.mrf.mxu0
    %v1709 = vadd.f32 %v1694, %v1708
    %v1710 = vpop.f32.mrf.mxu0
    %1711 = vdwg.mxu0
    %1712 = vmatpush.bf16.msra.mxu0 0
    %1713 = vmatpush.bf16.msra.mxu0 0
    %1714 = vmatpush.bf16.msra.mxu0 0
    %1715 = vmatpush.bf16.msra.mxu0 0
    %1716 = vmatpush.bf16.msra.mxu0 %v1400
    %1717 = vmatpush.bf16.msra.mxu0 %v1398
    %1718 = vmatpush.bf16.msra.mxu0 %v1396
    %1719 = vmatpush.bf16.msra.mxu0 %v1394
    %1720 = vmatmul.bf16.gmra.mxu0 %v1697
    %v1721 = vpop.f32.mrf.mxu0
    %v1722 = vadd.f32 %v1695, %v1721
    %v1723 = vpop.f32.mrf.mxu0
    %1724 = vdwg.mxu0
    %v1725 = vxor.u32 %v1709, 2147483648
    %v1726 = vxor.u32 %v1722, 2147483648
    %v1727 = vmul.f32 %v1725, 1.442695
    %v1728 = vpow.pop %v1727
    %v1729 = vmul.f32 %v1726, 1.442695
    %v1730 = vpow.pop %v1729
    %v1731 = vadd.f32 %v1728, 1.0
    %v1732 = vadd.f32 %v1730, 1.0
    %v1733 = vrcp.pop %v1731
    %v1734 = vmul.f32 %v1731, %v1733
    %v1735 = vsub.f32 1.0, %v1734
    %v1736 = vmul.f32 %v1733, %v1735
    %v1737 = vadd.f32 %v1733, %v1736
    %vm1738 = vweird.f32 %v1731
    %vm1739 = vweird.f32 %v1733
    %vm1740 = vmor %vm1738, %vm1739
    %v1741 = vsel %vm1740, %v1733, %v1737
    %v1742 = vand.u32 2147483647, %v1731
    %vm1743 = vcmp.eq.f32.partialorder %v1742, 8.507059e+37
    %v1744 = vand.u32 %v1731, 2147483648
    %v1745 = vor.u32 1.1754944e-38, %v1744
    %v1746 = vsel %vm1743, %v1745, %v1741
    %v1747 = vmul.f32 1.0, %v1746
    %v1748 = vrcp.pop %v1732
    %v1749 = vmul.f32 %v1732, %v1748
    %v1750 = vsub.f32 1.0, %v1749
    %v1751 = vmul.f32 %v1748, %v1750
    %v1752 = vadd.f32 %v1748, %v1751
    %vm1753 = vweird.f32 %v1732
    %vm1754 = vweird.f32 %v1748
    %vm1755 = vmor %vm1753, %vm1754
    %v1756 = vsel %vm1755, %v1748, %v1752
    %v1757 = vand.u32 2147483647, %v1732
    %vm1758 = vcmp.eq.f32.partialorder %v1757, 8.507059e+37
    %v1759 = vand.u32 %v1732, 2147483648
    %v1760 = vor.u32 1.1754944e-38, %v1759
    %v1761 = vsel %vm1758, %v1760, %v1756
    %v1762 = vmul.f32 1.0, %v1761
    %v1763 = vtanh.pop %v1722
    %1765 = vrot.lane.b32.xlu0 %v1692, 64
    %v1766 = vpop.permute.xlu0 %1765
    %v1768 = vmul.f32 %v1747, %v1766
    %1770 = vrot.lane.b32.xlu0 %v1763, 64
    %v1771 = vpop.permute.xlu0 %1770
    %v1773 = vmul.f32 %v1747, %v1771
    %1775 = vrot.lane.b32.xlu0 %v1773, 64
    %v1776 = vpop.permute.xlu0 %1775
    %v1778 = vadd.f32 %v1768, %v1776
    %v1779 = vtanh.pop %v1778
    %1781 = vrot.lane.b32.xlu0 %v1779, 64
    %v1782 = vpop.permute.xlu0 %1781
    %v1784 = vmul.f32 %v1762, %v1782
    %v1785 = vsel %vm139, %v1784, %v1687
    %1787 = vrot.lane.b32.xlu0 %v1778, 64
    %v1788 = vpop.permute.xlu0 %1787
    %v1790 = vsel %vm139, %v1788, %v1692
    %v1791 = vpack.c.bf16 %v1785, %v1785
    %v1792 = vld [vmem:[#allocation2 + $0x40] sm:$0xff]
    %v1793 = vld [vmem:[#allocation2 + $0x48] sm:$0xff]
    %v1795 = vsel %vm230, %v1791, 0
    %1797 = vmatpush.bf16.msra.mxu0 0
    %1798 = vmatpush.bf16.msra.mxu0 0
    %1799 = vmatpush.bf16.msra.mxu0 0
    %1800 = vmatpush.bf16.msra.mxu0 0
    %1801 = vmatpush.bf16.msra.mxu0 %v1399
    %1802 = vmatpush.bf16.msra.mxu0 %v1397
    %1803 = vmatpush.bf16.msra.mxu0 %v1395
    %1804 = vmatpush.bf16.msra.mxu0 %v1393
    %1805 = vmatmul.bf16.gmra.mxu0 %v1795
    %v1806 = vpop.f32.mrf.mxu0
    %v1807 = vadd.f32 %v1792, %v1806
    %v1808 = vpop.f32.mrf.mxu0
    %1809 = vdwg.mxu0
    %1810 = vmatpush.bf16.msra.mxu0 0
    %1811 = vmatpush.bf16.msra.mxu0 0
    %1812 = vmatpush.bf16.msra.mxu0 0
    %1813 = vmatpush.bf16.msra.mxu0 0
    %1814 = vmatpush.bf16.msra.mxu0 %v1400
    %1815 = vmatpush.bf16.msra.mxu0 %v1398
    %1816 = vmatpush.bf16.msra.mxu0 %v1396
    %1817 = vmatpush.bf16.msra.mxu0 %v1394
    %1818 = vmatmul.bf16.gmra.mxu0 %v1795
    %v1819 = vpop.f32.mrf.mxu0
    %v1820 = vadd.f32 %v1793, %v1819
    %v1821 = vpop.f32.mrf.mxu0
    %1822 = vdwg.mxu0
    %v1823 = vxor.u32 %v1807, 2147483648
    %v1824 = vxor.u32 %v1820, 2147483648
    %v1825 = vmul.f32 %v1823, 1.442695
    %v1826 = vpow.pop %v1825
    %v1827 = vmul.f32 %v1824, 1.442695
    %v1828 = vpow.pop %v1827
    %v1829 = vadd.f32 %v1826, 1.0
    %v1830 = vadd.f32 %v1828, 1.0
    %v1831 = vrcp.pop %v1829
    %v1832 = vmul.f32 %v1829, %v1831
    %v1833 = vsub.f32 1.0, %v1832
    %v1834 = vmul.f32 %v1831, %v1833
    %v1835 = vadd.f32 %v1831, %v1834
    %vm1836 = vweird.f32 %v1829
    %vm1837 = vweird.f32 %v1831
    %vm1838 = vmor %vm1836, %vm1837
    %v1839 = vsel %vm1838, %v1831, %v1835
    %v1840 = vand.u32 2147483647, %v1829
    %vm1841 = vcmp.eq.f32.partialorder %v1840, 8.507059e+37
    %v1842 = vand.u32 %v1829, 2147483648
    %v1843 = vor.u32 1.1754944e-38, %v1842
    %v1844 = vsel %vm1841, %v1843, %v1839
    %v1845 = vmul.f32 1.0, %v1844
    %v1846 = vrcp.pop %v1830
    %v1847 = vmul.f32 %v1830, %v1846
    %v1848 = vsub.f32 1.0, %v1847
    %v1849 = vmul.f32 %v1846, %v1848
    %v1850 = vadd.f32 %v1846, %v1849
    %vm1851 = vweird.f32 %v1830
    %vm1852 = vweird.f32 %v1846
    %vm1853 = vmor %vm1851, %vm1852
    %v1854 = vsel %vm1853, %v1846, %v1850
    %v1855 = vand.u32 2147483647, %v1830
    %vm1856 = vcmp.eq.f32.partialorder %v1855, 8.507059e+37
    %v1857 = vand.u32 %v1830, 2147483648
    %v1858 = vor.u32 1.1754944e-38, %v1857
    %v1859 = vsel %vm1856, %v1858, %v1854
    %v1860 = vmul.f32 1.0, %v1859
    %v1861 = vtanh.pop %v1820
    %1863 = vrot.lane.b32.xlu0 %v1790, 64
    %v1864 = vpop.permute.xlu0 %1863
    %v1866 = vmul.f32 %v1845, %v1864
    %1868 = vrot.lane.b32.xlu0 %v1861, 64
    %v1869 = vpop.permute.xlu0 %1868
    %v1871 = vmul.f32 %v1845, %v1869
    %1873 = vrot.lane.b32.xlu0 %v1871, 64
    %v1874 = vpop.permute.xlu0 %1873
    %v1876 = vadd.f32 %v1866, %v1874
    %v1877 = vtanh.pop %v1876
    %1879 = vrot.lane.b32.xlu0 %v1877, 64
    %v1880 = vpop.permute.xlu0 %1879
    %v1882 = vmul.f32 %v1860, %v1880
    %v1883 = vsel %vm141, %v1882, %v1785
    %1885 = vrot.lane.b32.xlu0 %v1876, 64
    %v1886 = vpop.permute.xlu0 %1885
    %v1888 = vsel %vm141, %v1886, %v1790
    %v1889 = vpack.c.bf16 %v1883, %v1883
    %v1890 = vld [vmem:[#allocation2 + $0x50] sm:$0xff]
    %v1891 = vld [vmem:[#allocation2 + $0x58] sm:$0xff]
    %v1893 = vsel %vm230, %v1889, 0
    %1895 = vmatpush.bf16.msra.mxu0 0
    %1896 = vmatpush.bf16.msra.mxu0 0
    %1897 = vmatpush.bf16.msra.mxu0 0
    %1898 = vmatpush.bf16.msra.mxu0 0
    %1899 = vmatpush.bf16.msra.mxu0 %v1399
    %1900 = vmatpush.bf16.msra.mxu0 %v1397
    %1901 = vmatpush.bf16.msra.mxu0 %v1395
    %1902 = vmatpush.bf16.msra.mxu0 %v1393
    %1903 = vmatmul.bf16.gmra.mxu0 %v1893
    %v1904 = vpop.f32.mrf.mxu0
    %v1905 = vadd.f32 %v1890, %v1904
    %v1906 = vpop.f32.mrf.mxu0
    %1907 = vdwg.mxu0
    %1908 = vmatpush.bf16.msra.mxu0 0
    %1909 = vmatpush.bf16.msra.mxu0 0
    %1910 = vmatpush.bf16.msra.mxu0 0
    %1911 = vmatpush.bf16.msra.mxu0 0
    %1912 = vmatpush.bf16.msra.mxu0 %v1400
    %1913 = vmatpush.bf16.msra.mxu0 %v1398
    %1914 = vmatpush.bf16.msra.mxu0 %v1396
    %1915 = vmatpush.bf16.msra.mxu0 %v1394
    %1916 = vmatmul.bf16.gmra.mxu0 %v1893
    %v1917 = vpop.f32.mrf.mxu0
    %v1918 = vadd.f32 %v1891, %v1917
    %v1919 = vpop.f32.mrf.mxu0
    %1920 = vdwg.mxu0
    %v1921 = vxor.u32 %v1905, 2147483648
    %v1922 = vxor.u32 %v1918, 2147483648
    %v1923 = vmul.f32 %v1921, 1.442695
    %v1924 = vpow.pop %v1923
    %v1925 = vmul.f32 %v1922, 1.442695
    %v1926 = vpow.pop %v1925
    %v1927 = vadd.f32 %v1924, 1.0
    %v1928 = vadd.f32 %v1926, 1.0
    %v1929 = vrcp.pop %v1927
    %v1930 = vmul.f32 %v1927, %v1929
    %v1931 = vsub.f32 1.0, %v1930
    %v1932 = vmul.f32 %v1929, %v1931
    %v1933 = vadd.f32 %v1929, %v1932
    %vm1934 = vweird.f32 %v1927
    %vm1935 = vweird.f32 %v1929
    %vm1936 = vmor %vm1934, %vm1935
    %v1937 = vsel %vm1936, %v1929, %v1933
    %v1938 = vand.u32 2147483647, %v1927
    %vm1939 = vcmp.eq.f32.partialorder %v1938, 8.507059e+37
    %v1940 = vand.u32 %v1927, 2147483648
    %v1941 = vor.u32 1.1754944e-38, %v1940
    %v1942 = vsel %vm1939, %v1941, %v1937
    %v1943 = vmul.f32 1.0, %v1942
    %v1944 = vrcp.pop %v1928
    %v1945 = vmul.f32 %v1928, %v1944
    %v1946 = vsub.f32 1.0, %v1945
    %v1947 = vmul.f32 %v1944, %v1946
    %v1948 = vadd.f32 %v1944, %v1947
    %vm1949 = vweird.f32 %v1928
    %vm1950 = vweird.f32 %v1944
    %vm1951 = vmor %vm1949, %vm1950
    %v1952 = vsel %vm1951, %v1944, %v1948
    %v1953 = vand.u32 2147483647, %v1928
    %vm1954 = vcmp.eq.f32.partialorder %v1953, 8.507059e+37
    %v1955 = vand.u32 %v1928, 2147483648
    %v1956 = vor.u32 1.1754944e-38, %v1955
    %v1957 = vsel %vm1954, %v1956, %v1952
    %v1958 = vmul.f32 1.0, %v1957
    %v1959 = vtanh.pop %v1918
    %1961 = vrot.lane.b32.xlu0 %v1888, 64
    %v1962 = vpop.permute.xlu0 %1961
    %v1964 = vmul.f32 %v1943, %v1962
    %1966 = vrot.lane.b32.xlu0 %v1959, 64
    %v1967 = vpop.permute.xlu0 %1966
    %v1969 = vmul.f32 %v1943, %v1967
    %1971 = vrot.lane.b32.xlu0 %v1969, 64
    %v1972 = vpop.permute.xlu0 %1971
    %v1974 = vadd.f32 %v1964, %v1972
    %v1975 = vtanh.pop %v1974
    %1977 = vrot.lane.b32.xlu0 %v1975, 64
    %v1978 = vpop.permute.xlu0 %1977
    %v1980 = vmul.f32 %v1958, %v1978
    %v1981 = vsel %vm143, %v1980, %v1883
    %1983 = vrot.lane.b32.xlu0 %v1974, 64
    %v1984 = vpop.permute.xlu0 %1983
    %v1986 = vsel %vm143, %v1984, %v1888
    %v1987 = vpack.c.bf16 %v1981, %v1981
    %v1988 = vld [vmem:[#allocation2 + $0x60] sm:$0xff]
    %v1989 = vld [vmem:[#allocation2 + $0x68] sm:$0xff]
    %v1991 = vsel %vm230, %v1987, 0
    %1993 = vmatpush.bf16.msra.mxu0 0
    %1994 = vmatpush.bf16.msra.mxu0 0
    %1995 = vmatpush.bf16.msra.mxu0 0
    %1996 = vmatpush.bf16.msra.mxu0 0
    %1997 = vmatpush.bf16.msra.mxu0 %v1399
    %1998 = vmatpush.bf16.msra.mxu0 %v1397
    %1999 = vmatpush.bf16.msra.mxu0 %v1395
    %2000 = vmatpush.bf16.msra.mxu0 %v1393
    %2001 = vmatmul.bf16.gmra.mxu0 %v1991
    %v2002 = vpop.f32.mrf.mxu0
    %v2003 = vadd.f32 %v1988, %v2002
    %v2004 = vpop.f32.mrf.mxu0
    %2005 = vdwg.mxu0
    %2006 = vmatpush.bf16.msra.mxu0 0
    %2007 = vmatpush.bf16.msra.mxu0 0
    %2008 = vmatpush.bf16.msra.mxu0 0
    %2009 = vmatpush.bf16.msra.mxu0 0
    %2010 = vmatpush.bf16.msra.mxu0 %v1400
    %2011 = vmatpush.bf16.msra.mxu0 %v1398
    %2012 = vmatpush.bf16.msra.mxu0 %v1396
    %2013 = vmatpush.bf16.msra.mxu0 %v1394
    %2014 = vmatmul.bf16.gmra.mxu0 %v1991
    %v2015 = vpop.f32.mrf.mxu0
    %v2016 = vadd.f32 %v1989, %v2015
    %v2017 = vpop.f32.mrf.mxu0
    %2018 = vdwg.mxu0
    %v2019 = vxor.u32 %v2003, 2147483648
    %v2020 = vxor.u32 %v2016, 2147483648
    %v2021 = vmul.f32 %v2019, 1.442695
    %v2022 = vpow.pop %v2021
    %v2023 = vmul.f32 %v2020, 1.442695
    %v2024 = vpow.pop %v2023
    %v2025 = vadd.f32 %v2022, 1.0
    %v2026 = vadd.f32 %v2024, 1.0
    %v2027 = vrcp.pop %v2025
    %v2028 = vmul.f32 %v2025, %v2027
    %v2029 = vsub.f32 1.0, %v2028
    %v2030 = vmul.f32 %v2027, %v2029
    %v2031 = vadd.f32 %v2027, %v2030
    %vm2032 = vweird.f32 %v2025
    %vm2033 = vweird.f32 %v2027
    %vm2034 = vmor %vm2032, %vm2033
    %v2035 = vsel %vm2034, %v2027, %v2031
    %v2036 = vand.u32 2147483647, %v2025
    %vm2037 = vcmp.eq.f32.partialorder %v2036, 8.507059e+37
    %v2038 = vand.u32 %v2025, 2147483648
    %v2039 = vor.u32 1.1754944e-38, %v2038
    %v2040 = vsel %vm2037, %v2039, %v2035
    %v2041 = vmul.f32 1.0, %v2040
    %v2042 = vrcp.pop %v2026
    %v2043 = vmul.f32 %v2026, %v2042
    %v2044 = vsub.f32 1.0, %v2043
    %v2045 = vmul.f32 %v2042, %v2044
    %v2046 = vadd.f32 %v2042, %v2045
    %vm2047 = vweird.f32 %v2026
    %vm2048 = vweird.f32 %v2042
    %vm2049 = vmor %vm2047, %vm2048
    %v2050 = vsel %vm2049, %v2042, %v2046
    %v2051 = vand.u32 2147483647, %v2026
    %vm2052 = vcmp.eq.f32.partialorder %v2051, 8.507059e+37
    %v2053 = vand.u32 %v2026, 2147483648
    %v2054 = vor.u32 1.1754944e-38, %v2053
    %v2055 = vsel %vm2052, %v2054, %v2050
    %v2056 = vmul.f32 1.0, %v2055
    %v2057 = vtanh.pop %v2016
    %2059 = vrot.lane.b32.xlu0 %v1986, 64
    %v2060 = vpop.permute.xlu0 %2059
    %v2062 = vmul.f32 %v2041, %v2060
    %2064 = vrot.lane.b32.xlu0 %v2057, 64
    %v2065 = vpop.permute.xlu0 %2064
    %v2067 = vmul.f32 %v2041, %v2065
    %2069 = vrot.lane.b32.xlu0 %v2067, 64
    %v2070 = vpop.permute.xlu0 %2069
    %v2072 = vadd.f32 %v2062, %v2070
    %v2073 = vtanh.pop %v2072
    %2075 = vrot.lane.b32.xlu0 %v2073, 64
    %v2076 = vpop.permute.xlu0 %2075
    %v2078 = vmul.f32 %v2056, %v2076
    %v2079 = vsel %vm145, %v2078, %v1981
    %2081 = vrot.lane.b32.xlu0 %v2072, 64
    %v2082 = vpop.permute.xlu0 %2081
    %v2084 = vsel %vm145, %v2082, %v1986
    %v2085 = vpack.c.bf16 %v2079, %v2079
    %v2086 = vld [vmem:[#allocation2 + $0x70] sm:$0xff]
    %v2087 = vld [vmem:[#allocation2 + $0x78] sm:$0xff]
    %v2089 = vsel %vm230, %v2085, 0
    %2091 = vmatpush.bf16.msra.mxu0 0
    %2092 = vmatpush.bf16.msra.mxu0 0
    %2093 = vmatpush.bf16.msra.mxu0 0
    %2094 = vmatpush.bf16.msra.mxu0 0
    %2095 = vmatpush.bf16.msra.mxu0 %v1399
    %2096 = vmatpush.bf16.msra.mxu0 %v1397
    %2097 = vmatpush.bf16.msra.mxu0 %v1395
    %2098 = vmatpush.bf16.msra.mxu0 %v1393
    %2099 = vmatmul.bf16.gmra.mxu0 %v2089
    %v2100 = vpop.f32.mrf.mxu0
    %v2101 = vadd.f32 %v2086, %v2100
    %v2102 = vpop.f32.mrf.mxu0
    %2103 = vdwg.mxu0
    %2104 = vmatpush.bf16.msra.mxu0 0
    %2105 = vmatpush.bf16.msra.mxu0 0
    %2106 = vmatpush.bf16.msra.mxu0 0
    %2107 = vmatpush.bf16.msra.mxu0 0
    %2108 = vmatpush.bf16.msra.mxu0 %v1400
    %2109 = vmatpush.bf16.msra.mxu0 %v1398
    %2110 = vmatpush.bf16.msra.mxu0 %v1396
    %2111 = vmatpush.bf16.msra.mxu0 %v1394
    %2112 = vmatmul.bf16.gmra.mxu0 %v2089
    %v2113 = vpop.f32.mrf.mxu0
    %v2114 = vadd.f32 %v2087, %v2113
    %v2115 = vpop.f32.mrf.mxu0
    %2116 = vdwg.mxu0
    %v2117 = vxor.u32 %v2101, 2147483648
    %v2118 = vxor.u32 %v2114, 2147483648
    %v2119 = vmul.f32 %v2117, 1.442695
    %v2120 = vpow.pop %v2119
    %v2121 = vmul.f32 %v2118, 1.442695
    %v2122 = vpow.pop %v2121
    %v2123 = vadd.f32 %v2120, 1.0
    %v2124 = vadd.f32 %v2122, 1.0
    %v2125 = vrcp.pop %v2123
    %v2126 = vmul.f32 %v2123, %v2125
    %v2127 = vsub.f32 1.0, %v2126
    %v2128 = vmul.f32 %v2125, %v2127
    %v2129 = vadd.f32 %v2125, %v2128
    %vm2130 = vweird.f32 %v2123
    %vm2131 = vweird.f32 %v2125
    %vm2132 = vmor %vm2130, %vm2131
    %v2133 = vsel %vm2132, %v2125, %v2129
    %v2134 = vand.u32 2147483647, %v2123
    %vm2135 = vcmp.eq.f32.partialorder %v2134, 8.507059e+37
    %v2136 = vand.u32 %v2123, 2147483648
    %v2137 = vor.u32 1.1754944e-38, %v2136
    %v2138 = vsel %vm2135, %v2137, %v2133
    %v2139 = vmul.f32 1.0, %v2138
    %v2140 = vrcp.pop %v2124
    %v2141 = vmul.f32 %v2124, %v2140
    %v2142 = vsub.f32 1.0, %v2141
    %v2143 = vmul.f32 %v2140, %v2142
    %v2144 = vadd.f32 %v2140, %v2143
    %vm2145 = vweird.f32 %v2124
    %vm2146 = vweird.f32 %v2140
    %vm2147 = vmor %vm2145, %vm2146
    %v2148 = vsel %vm2147, %v2140, %v2144
    %v2149 = vand.u32 2147483647, %v2124
    %vm2150 = vcmp.eq.f32.partialorder %v2149, 8.507059e+37
    %v2151 = vand.u32 %v2124, 2147483648
    %v2152 = vor.u32 1.1754944e-38, %v2151
    %v2153 = vsel %vm2150, %v2152, %v2148
    %v2154 = vmul.f32 1.0, %v2153
    %v2155 = vtanh.pop %v2114
    %2157 = vrot.lane.b32.xlu0 %v2084, 64
    %v2158 = vpop.permute.xlu0 %2157
    %v2160 = vmul.f32 %v2139, %v2158
    %2162 = vrot.lane.b32.xlu0 %v2155, 64
    %v2163 = vpop.permute.xlu0 %2162
    %v2165 = vmul.f32 %v2139, %v2163
    %2167 = vrot.lane.b32.xlu0 %v2165, 64
    %v2168 = vpop.permute.xlu0 %2167
    %v2170 = vadd.f32 %v2160, %v2168
    %v2171 = vtanh.pop %v2170
    %2173 = vrot.lane.b32.xlu0 %v2171, 64
    %v2174 = vpop.permute.xlu0 %2173
    %v2176 = vmul.f32 %v2154, %v2174
    %v2177 = vsel %vm147, %v2176, %v2079
    %v2178 = vld [vmem:[%s8] sm:$0x1]
    %v2180 = vperm.slane %v2178, 0
    %v2182 = vmul.f32 %v2177, %v2180
    %v2183 = vsel %vm230, %v2182, 0.0
    %2184 = vadd.xlane.f32.xlu0 %v2183
    %v2185 = vpop.xlane.xlu0 %2184
    %v2186 = vld [vmem:[#allocation3] sm:$0x1]
    %v2188 = vperm.slane %v2186, 0
    %v2190 = vadd.f32 %v2185, %v2188
    %vm2191 = vcmask 1024
    %2192 = vst.msk [vmem:[%s10] sm:$0x3] %vm2191, %v2190
    // Predicated region
    $region66: #{tpu_custom_call.1} parent=1 // pred_check
      _
    $region67: #{tpu_custom_call.1} parent=1 // pred_check_branch
      %2194 = sbr.rel (0) target = $region69
    $region68: #{tpu_custom_call.1} parent=1 // pred_region
      _
    $region69: #{tpu_custom_call.1} parent=1 // pred_fallthru
      _
    // Predicated region
    $region70: #{tpu_custom_call.1} parent=1 // pred_check
      _
    $region71: #{tpu_custom_call.1} parent=1 // pred_check_branch
      %2196 = sbr.rel (0) target = $region73
    $region72: #{tpu_custom_call.1} parent=1 // pred_region
      _
    $region73: #{tpu_custom_call.1} parent=1 // pred_fallthru
      _
    %2197 = vsyncpa [#allocation5], 1
    %2198 = vsyncpa [#allocation7], 1
    %2199 = vsyncpa [#allocation10], 1
    %2200 = vsyncpa [#allocation13], 1

</llo_original>
